<compile_context>
chip_gen: v7x
topology: tpu7x:2x2x1
jax: 0.10.0
libtpu: 0.0.40
codegen_flags: <defaults>
</compile_context>

<pallas_src>
import jax
import jax.numpy as jnp
from jax.experimental import pallas as pl
from jax.experimental.pallas import tpu as pltpu

BN_EPS = 1e-5

N_BN = 9          # Liner_Modules (5 encoder + 4 decoder)
VEC_W = 256       # lane width of the packed bias/gamma/beta buffer
PAD_W = 128       # padded width for the small hidden layers
FEAT_DIM = 16     # bottleneck (x_feature) width


# ---------------------------------------------------------------------------
# Fused Pallas kernel: whole Auto_encoder forward in one launch (no grid)
# ---------------------------------------------------------------------------
def _auto_encoder_kernel(x_ref, vec_ref, bfin_ref, w0_ref, w1_ref, wmid_ref,
                         w8_ref, wfin_hbm, out_ref, feat_ref,
                         wfin_vmem, wfin_sem):
    # Kick off the final-layer weight DMA now; wait right before the last dot.
    wfin_copy = pltpu.make_async_copy(wfin_hbm, wfin_vmem, wfin_sem)
    wfin_copy.start()

    def liner_module(h, w_bf16, li, dp):
        """relu(batchnorm(h @ W + b)) at padded width dp, training-mode BN."""
        blk = vec_ref[li]                               # (3, 256) f32
        b, g, beta = blk[0:1, :dp], blk[1:2, :dp], blk[2:3, :dp]
        y = jnp.dot(h.astype(jnp.bfloat16), w_bf16,
                    preferred_element_type=jnp.float32) + b
        # Biased batch variance via E[y^2] - mean^2: the two reductions are
        # independent (overlap on the XLU) and one VPU pass over y disappears.
        mean = jnp.mean(y, axis=0, keepdims=True)
        ex2 = jnp.mean(y * y, axis=0, keepdims=True)
        var = jnp.maximum(ex2 - mean * mean, 0.0)
        s = g * jax.lax.rsqrt(var + BN_EPS)             # EUP rsqrt
        t = beta - mean * s
        return jnp.maximum(y * s + t, 0.0)              # ReLU

    h = x_ref[...]                                      # (B, in_dim) f32
    h = liner_module(h, w0_ref[...], 0, 256)            # enc0: in_dim -> 256
    h = liner_module(h, w1_ref[...], 1, 128)            # enc1: 256 -> 128
    for i in range(6):                                  # enc2..enc4, dec0..dec2
        h = liner_module(h, wmid_ref[i], 2 + i, 128)    # all padded to 128
        if 2 + i == 4:                                  # bottleneck -> x_feature
            feat_ref[...] = h                           # dense (B, 128) store
    h = liner_module(h, w8_ref[...], 8, 256)            # dec3: 128 -> 256

    # Final plain nn.Linear(256, output_dim); its weight DMA was hidden behind
    # the 9-layer compute chain above.
    wfin_copy.wait()
    out_ref[...] = (
        jnp.dot(h.astype(jnp.bfloat16), wfin_vmem[...],
                preferred_element_type=jnp.float32) + bfin_ref[...])


# ---------------------------------------------------------------------------
# Wrapper: one pallas_call, 8 operands, empty grid
# ---------------------------------------------------------------------------
def auto_encoder_pallas(x, packed):
    B = x.shape[0]
    out_dim = packed["w_final"].shape[1]

    vmem = pl.BlockSpec(memory_space=pltpu.MemorySpace.VMEM)
    hbm = pl.BlockSpec(memory_space=pl.ANY)     # raw HBM ref, manual DMA

    out, feat_pad = pl.pallas_call(
        _auto_encoder_kernel,
        out_shape=(
            jax.ShapeDtypeStruct((B, out_dim), jnp.float32),   # x_out (lane-dense)
            jax.ShapeDtypeStruct((B, PAD_W), jnp.float32),     # x_feature (padded)
        ),
        in_specs=[vmem, vmem, vmem, vmem, vmem, vmem, vmem, hbm],
        out_specs=(vmem, vmem),
        scratch_shapes=[
            pltpu.VMEM(packed["w_final"].shape, jnp.bfloat16),  # final W buffer
            pltpu.SemaphoreType.DMA(()),                        # its DMA sem
        ],
    )(x, packed["vec"], packed["b_final"], packed["w0"], packed["w1"],
      packed["wmid"], packed["w8"], packed["w_final"])
    return out, feat_pad[:, :FEAT_DIM]


@jax.jit
def auto_encoder_forward(x, packed):
    """Returns (x_out, x_feature) like Auto_encoder.forward."""
    return auto_encoder_pallas(x, packed)


# ---------------------------------------------------------------------------
# Parameter construction (deterministic, PyTorch-like Linear init) + packing
# ---------------------------------------------------------------------------
def _init_linear(key, din, dout):
    kw, kb = jax.random.split(key)
    bound = 1.0 / jnp.sqrt(jnp.float32(din))
    w_t = jax.random.uniform(kw, (din, dout), jnp.float32, -bound, bound)
    b = jax.random.uniform(kb, (1, dout), jnp.float32, -bound, bound)
    return w_t, b


def init_auto_encoder_params(key, input_dim=640, output_dim=640):
    enc_dims = [(input_dim, 256), (256, 128), (128, 64), (64, 32), (32, 16)]
    dec_dims = [(16, 32), (32, 64), (64, 128), (128, 256)]
    keys = jax.random.split(key, len(enc_dims) + len(dec_dims) + 1)
    params = {"encoder": [], "decoder": []}
    k = 0
    for group, dims in (("encoder", enc_dims), ("decoder", dec_dims)):
        for din, dout in dims:
            w_t, b = _init_linear(keys[k], din, dout)
            k += 1
            params[group].append(dict(
                w_t=w_t, b=b,
                gamma=jnp.ones((1, dout), jnp.float32),
                beta=jnp.zeros((1, dout), jnp.float32)))
    w_t, b = _init_linear(keys[k], 256, output_dim)
    params["final"] = dict(w_t=w_t, b=b)
    return params


def pack_params(params):
    """Pack per-layer params into a handful of lane-dense kernel operands."""
    layers = params["encoder"] + params["decoder"]

    # (9, 3, 256) f32: per BN layer rows = [bias, gamma, beta], zero-padded.
    vec = jnp.zeros((N_BN, 3, VEC_W), jnp.float32)
    for li, layer in enumerate(layers):
        dout = layer["w_t"].shape[1]
        vec = vec.at[li, 0, :dout].set(layer["b"][0])
        vec = vec.at[li, 1, :dout].set(layer["gamma"][0])
        vec = vec.at[li, 2, :dout].set(layer["beta"][0])

    # Six <=128x128 weights stacked into one zero-padded (6,128,128) bf16 pack.
    wmid = jnp.zeros((6, PAD_W, PAD_W), jnp.float32)
    for i, li in enumerate(range(2, 8)):
        w = layers[li]["w_t"]
        din, dout = w.shape
        wmid = wmid.at[i, :din, :dout].set(w)

    return dict(
        vec=vec,
        b_final=params["final"]["b"],                         # (1, out_dim) f32
        w0=layers[0]["w_t"].astype(jnp.bfloat16),             # (in_dim, 256)
        w1=layers[1]["w_t"].astype(jnp.bfloat16),             # (256, 128)
        wmid=wmid.astype(jnp.bfloat16),                       # (6, 128, 128)
        w8=layers[8]["w_t"].astype(jnp.bfloat16),             # (128, 256)
        w_final=params["final"]["w_t"].astype(jnp.bfloat16),  # (256, out_dim)
    )


# ---------------------------------------------------------------------------
# Pure-JAX references for correctness checking
# ---------------------------------------------------------------------------
def _lbr(h, layer, cast_bf16):
    w = layer["w_t"]
    if cast_bf16:
        y = jnp.dot(h.astype(jnp.bfloat16), w.astype(jnp.bfloat16),
                    preferred_element_type=jnp.float32) + layer["b"]
    else:
        y = h @ w + layer["b"]
    m = jnp.mean(y, axis=0, keepdims=True)
    v = jnp.mean((y - m) ** 2, axis=0, keepdims=True)
    y = (y - m) / jnp.sqrt(v + BN_EPS) * layer["gamma"] + layer["beta"]
    return jnp.maximum(y, 0.0)


def _ref_forward(x, params, cast_bf16=False):
    h = x
    for layer in params["encoder"]:
        h = _lbr(h, layer, cast_bf16)
    feat = h
    for layer in params["decoder"]:
        h = _lbr(h, layer, cast_bf16)
    wf, bf = params["final"]["w_t"], params["final"]["b"]
    if cast_bf16:
        out = jnp.dot(h.astype(jnp.bfloat16), wf.astype(jnp.bfloat16),
                      preferred_element_type=jnp.float32) + bf
    else:
        out = h @ wf + bf
    return out, feat


if __name__ == "__main__":
    INPUT_DIM, OUTPUT_DIM, BATCH = 640, 640, 8   # BatchNorm needs batch > 1

    key = jax.random.PRNGKey(0)
    k_params, k_x = jax.random.split(key)

    params = init_auto_encoder_params(k_params, INPUT_DIM, OUTPUT_DIM)
    packed = pack_params(params)
    x = jax.random.normal(k_x, (BATCH, INPUT_DIM), jnp.float32)

    out, feat = auto_encoder_forward(x, packed)
    out, feat = jax.block_until_ready(out), jax.block_until_ready(feat)

    assert out.shape == (BATCH, OUTPUT_DIM) and out.dtype == jnp.float32
    assert feat.shape == (BATCH, FEAT_DIM) and feat.dtype == jnp.float32

    # Matched-precision reference (same bf16-weight matmuls, f32 BN math).
    ref_out, ref_feat = _ref_forward(x, params, cast_bf16=True)
    assert jnp.allclose(out, ref_out, atol=1e-2, rtol=1e-2)
    assert jnp.allclose(feat, ref_feat, atol=1e-2, rtol=1e-2)

    # Pure-f32 reference: loose sanity bound (bf16 weights are the only
    # approximation relative to the PyTorch f32 forward).
    f32_out, f32_feat = _ref_forward(x, params, cast_bf16=False)
    assert float(jnp.max(jnp.abs(out - f32_out))) < 0.25
    assert float(jnp.max(jnp.abs(feat - f32_feat))) < 0.25

    print("KERNEL_OK")
</pallas_src>

<mosaic_0001>
module attributes {stable_mosaic.version = 11 : i64} {
  func.func @_auto_encoder_kernel(%arg0: memref<8x640xf32, #tpu.memory_space<vmem>>, %arg1: memref<9x3x256xf32, #tpu.memory_space<vmem>>, %arg2: memref<1x640xf32, #tpu.memory_space<vmem>>, %arg3: memref<640x256xbf16, #tpu.memory_space<vmem>>, %arg4: memref<256x128xbf16, #tpu.memory_space<vmem>>, %arg5: memref<6x128x128xbf16, #tpu.memory_space<vmem>>, %arg6: memref<128x256xbf16, #tpu.memory_space<vmem>>, %arg7: memref<256x640xbf16, #tpu.memory_space<any>>, %arg8: memref<8x640xf32, #tpu.memory_space<vmem>>, %arg9: memref<8x128xf32, #tpu.memory_space<vmem>>, %arg10: memref<256x640xbf16, #tpu.memory_space<vmem>>, %arg11: memref<!tpu.dma_semaphore, #tpu.memory_space<semaphore_mem>>) attributes {dimension_semantics = [], scalar_prefetch = 0 : i64, scratch_operands = 2 : i64, tpu.core_type = #tpu.core_type<tc>} {
    tpu.enqueue_dma source(%arg7 : memref<256x640xbf16, #tpu.memory_space<any>>) target(%arg10 : memref<256x640xbf16, #tpu.memory_space<vmem>>) target_semaphore(%arg11 : memref<!tpu.dma_semaphore, #tpu.memory_space<semaphore_mem>>)
    %c0 = arith.constant 0 : index
    %c0_0 = arith.constant 0 : index
    %0 = vector.load %arg0[%c0, %c0_0] : memref<8x640xf32, #tpu.memory_space<vmem>>, vector<8x640xf32>
    %c0_1 = arith.constant 0 : index
    %c0_2 = arith.constant 0 : index
    %1 = vector.load %arg3[%c0_1, %c0_2] : memref<640x256xbf16, #tpu.memory_space<vmem>>, vector<640x256xbf16>
    %c0_3 = arith.constant 0 : index
    %c0_4 = arith.constant 0 : index
    %c0_5 = arith.constant 0 : index
    %2 = vector.load %arg1[%c0_3, %c0_4, %c0_5] : memref<9x3x256xf32, #tpu.memory_space<vmem>>, vector<1x3x256xf32>
    %3 = vector.shape_cast %2 : vector<1x3x256xf32> to vector<3x256xf32>
    %4 = vector.extract_strided_slice %3 {offsets = [0, 0], sizes = [1, 256], strides = [1, 1]} : vector<3x256xf32> to vector<1x256xf32>
    %5 = vector.extract_strided_slice %3 {offsets = [1, 0], sizes = [1, 256], strides = [1, 1]} : vector<3x256xf32> to vector<1x256xf32>
    %6 = vector.extract_strided_slice %3 {offsets = [2, 0], sizes = [1, 256], strides = [1, 1]} : vector<3x256xf32> to vector<1x256xf32>
    %7 = arith.truncf %0 : vector<8x640xf32> to vector<8x640xbf16>
    %cst = arith.constant dense<0.000000e+00> : vector<8x256xf32>
    %8 = tpu.matmul %7, %1, %cst {dimension_numbers = #tpu.dot_dimension_numbers<[1], [0], [0], [1], [0, 0, 1, 1], [], []>} : vector<8x640xbf16>, vector<640x256xbf16>, vector<8x256xf32> -> vector<8x256xf32>
    %9 = vector.broadcast %4 : vector<1x256xf32> to vector<8x256xf32>
    %10 = arith.addf %8, %9 : vector<8x256xf32>
    %cst_6 = arith.constant dense<0.000000e+00> : vector<256xf32>
    %11 = vector.multi_reduction <add>, %10, %cst_6 [0] : vector<8x256xf32> to vector<256xf32>
    %12 = vector.shape_cast %11 : vector<256xf32> to vector<1x256xf32>
    %cst_7 = arith.constant 8.000000e+00 : f32
    %13 = vector.broadcast %cst_7 : f32 to vector<1x256xf32>
    %14 = arith.divf %12, %13 : vector<1x256xf32>
    %15 = arith.mulf %10, %10 : vector<8x256xf32>
    %cst_8 = arith.constant dense<0.000000e+00> : vector<256xf32>
    %16 = vector.multi_reduction <add>, %15, %cst_8 [0] : vector<8x256xf32> to vector<256xf32>
    %17 = vector.shape_cast %16 : vector<256xf32> to vector<1x256xf32>
    %cst_9 = arith.constant 8.000000e+00 : f32
    %18 = vector.broadcast %cst_9 : f32 to vector<1x256xf32>
    %19 = arith.divf %17, %18 : vector<1x256xf32>
    %20 = arith.mulf %14, %14 : vector<1x256xf32>
    %21 = arith.subf %19, %20 : vector<1x256xf32>
    %cst_10 = arith.constant 0.000000e+00 : f32
    %22 = vector.broadcast %cst_10 : f32 to vector<1x256xf32>
    %23 = arith.maximumf %21, %22 : vector<1x256xf32>
    %cst_11 = arith.constant 9.99999974E-6 : f32
    %24 = vector.broadcast %cst_11 : f32 to vector<1x256xf32>
    %25 = arith.addf %23, %24 : vector<1x256xf32>
    %26 = math.rsqrt %25 : vector<1x256xf32>
    %27 = arith.mulf %5, %26 : vector<1x256xf32>
    %28 = arith.mulf %14, %27 : vector<1x256xf32>
    %29 = arith.subf %6, %28 : vector<1x256xf32>
    %30 = vector.broadcast %27 : vector<1x256xf32> to vector<8x256xf32>
    %31 = arith.mulf %10, %30 : vector<8x256xf32>
    %32 = vector.broadcast %29 : vector<1x256xf32> to vector<8x256xf32>
    %33 = arith.addf %31, %32 : vector<8x256xf32>
    %cst_12 = arith.constant 0.000000e+00 : f32
    %34 = vector.broadcast %cst_12 : f32 to vector<8x256xf32>
    %35 = arith.maximumf %33, %34 : vector<8x256xf32>
    %c0_13 = arith.constant 0 : index
    %c0_14 = arith.constant 0 : index
    %36 = vector.load %arg4[%c0_13, %c0_14] : memref<256x128xbf16, #tpu.memory_space<vmem>>, vector<256x128xbf16>
    %c1 = arith.constant 1 : index
    %c0_15 = arith.constant 0 : index
    %c0_16 = arith.constant 0 : index
    %37 = vector.load %arg1[%c1, %c0_15, %c0_16] : memref<9x3x256xf32, #tpu.memory_space<vmem>>, vector<1x3x256xf32>
    %38 = vector.shape_cast %37 : vector<1x3x256xf32> to vector<3x256xf32>
    %39 = vector.extract_strided_slice %38 {offsets = [0, 0], sizes = [1, 128], strides = [1, 1]} : vector<3x256xf32> to vector<1x128xf32>
    %40 = vector.extract_strided_slice %38 {offsets = [1, 0], sizes = [1, 128], strides = [1, 1]} : vector<3x256xf32> to vector<1x128xf32>
    %41 = vector.extract_strided_slice %38 {offsets = [2, 0], sizes = [1, 128], strides = [1, 1]} : vector<3x256xf32> to vector<1x128xf32>
    %42 = arith.truncf %35 : vector<8x256xf32> to vector<8x256xbf16>
    %cst_17 = arith.constant dense<0.000000e+00> : vector<8x128xf32>
    %43 = tpu.matmul %42, %36, %cst_17 {dimension_numbers = #tpu.dot_dimension_numbers<[1], [0], [0], [1], [0, 0, 1, 1], [], []>} : vector<8x256xbf16>, vector<256x128xbf16>, vector<8x128xf32> -> vector<8x128xf32>
    %44 = vector.broadcast %39 : vector<1x128xf32> to vector<8x128xf32>
    %45 = arith.addf %43, %44 : vector<8x128xf32>
    %cst_18 = arith.constant dense<0.000000e+00> : vector<128xf32>
    %46 = vector.multi_reduction <add>, %45, %cst_18 [0] : vector<8x128xf32> to vector<128xf32>
    %47 = vector.shape_cast %46 : vector<128xf32> to vector<1x128xf32>
    %cst_19 = arith.constant 8.000000e+00 : f32
    %48 = vector.broadcast %cst_19 : f32 to vector<1x128xf32>
    %49 = arith.divf %47, %48 : vector<1x128xf32>
    %50 = arith.mulf %45, %45 : vector<8x128xf32>
    %cst_20 = arith.constant dense<0.000000e+00> : vector<128xf32>
    %51 = vector.multi_reduction <add>, %50, %cst_20 [0] : vector<8x128xf32> to vector<128xf32>
    %52 = vector.shape_cast %51 : vector<128xf32> to vector<1x128xf32>
    %cst_21 = arith.constant 8.000000e+00 : f32
    %53 = vector.broadcast %cst_21 : f32 to vector<1x128xf32>
    %54 = arith.divf %52, %53 : vector<1x128xf32>
    %55 = arith.mulf %49, %49 : vector<1x128xf32>
    %56 = arith.subf %54, %55 : vector<1x128xf32>
    %cst_22 = arith.constant 0.000000e+00 : f32
    %57 = vector.broadcast %cst_22 : f32 to vector<1x128xf32>
    %58 = arith.maximumf %56, %57 : vector<1x128xf32>
    %cst_23 = arith.constant 9.99999974E-6 : f32
    %59 = vector.broadcast %cst_23 : f32 to vector<1x128xf32>
    %60 = arith.addf %58, %59 : vector<1x128xf32>
    %61 = math.rsqrt %60 : vector<1x128xf32>
    %62 = arith.mulf %40, %61 : vector<1x128xf32>
    %63 = arith.mulf %49, %62 : vector<1x128xf32>
    %64 = arith.subf %41, %63 : vector<1x128xf32>
    %65 = vector.broadcast %62 : vector<1x128xf32> to vector<8x128xf32>
    %66 = arith.mulf %45, %65 : vector<8x128xf32>
    %67 = vector.broadcast %64 : vector<1x128xf32> to vector<8x128xf32>
    %68 = arith.addf %66, %67 : vector<8x128xf32>
    %cst_24 = arith.constant 0.000000e+00 : f32
    %69 = vector.broadcast %cst_24 : f32 to vector<8x128xf32>
    %70 = arith.maximumf %68, %69 : vector<8x128xf32>
    %c0_25 = arith.constant 0 : index
    %c0_26 = arith.constant 0 : index
    %c0_27 = arith.constant 0 : index
    %71 = vector.load %arg5[%c0_25, %c0_26, %c0_27] : memref<6x128x128xbf16, #tpu.memory_space<vmem>>, vector<1x128x128xbf16>
    %72 = vector.shape_cast %71 : vector<1x128x128xbf16> to vector<128x128xbf16>
    %c2 = arith.constant 2 : index
    %c0_28 = arith.constant 0 : index
    %c0_29 = arith.constant 0 : index
    %73 = vector.load %arg1[%c2, %c0_28, %c0_29] : memref<9x3x256xf32, #tpu.memory_space<vmem>>, vector<1x3x256xf32>
    %74 = vector.shape_cast %73 : vector<1x3x256xf32> to vector<3x256xf32>
    %75 = vector.extract_strided_slice %74 {offsets = [0, 0], sizes = [1, 128], strides = [1, 1]} : vector<3x256xf32> to vector<1x128xf32>
    %76 = vector.extract_strided_slice %74 {offsets = [1, 0], sizes = [1, 128], strides = [1, 1]} : vector<3x256xf32> to vector<1x128xf32>
    %77 = vector.extract_strided_slice %74 {offsets = [2, 0], sizes = [1, 128], strides = [1, 1]} : vector<3x256xf32> to vector<1x128xf32>
    %78 = arith.truncf %70 : vector<8x128xf32> to vector<8x128xbf16>
    %cst_30 = arith.constant dense<0.000000e+00> : vector<8x128xf32>
    %79 = tpu.matmul %78, %72, %cst_30 {dimension_numbers = #tpu.dot_dimension_numbers<[1], [0], [0], [1], [0, 0, 1, 1], [], []>} : vector<8x128xbf16>, vector<128x128xbf16>, vector<8x128xf32> -> vector<8x128xf32>
    %80 = vector.broadcast %75 : vector<1x128xf32> to vector<8x128xf32>
    %81 = arith.addf %79, %80 : vector<8x128xf32>
    %cst_31 = arith.constant dense<0.000000e+00> : vector<128xf32>
    %82 = vector.multi_reduction <add>, %81, %cst_31 [0] : vector<8x128xf32> to vector<128xf32>
    %83 = vector.shape_cast %82 : vector<128xf32> to vector<1x128xf32>
    %cst_32 = arith.constant 8.000000e+00 : f32
    %84 = vector.broadcast %cst_32 : f32 to vector<1x128xf32>
    %85 = arith.divf %83, %84 : vector<1x128xf32>
    %86 = arith.mulf %81, %81 : vector<8x128xf32>
    %cst_33 = arith.constant dense<0.000000e+00> : vector<128xf32>
    %87 = vector.multi_reduction <add>, %86, %cst_33 [0] : vector<8x128xf32> to vector<128xf32>
    %88 = vector.shape_cast %87 : vector<128xf32> to vector<1x128xf32>
    %cst_34 = arith.constant 8.000000e+00 : f32
    %89 = vector.broadcast %cst_34 : f32 to vector<1x128xf32>
    %90 = arith.divf %88, %89 : vector<1x128xf32>
    %91 = arith.mulf %85, %85 : vector<1x128xf32>
    %92 = arith.subf %90, %91 : vector<1x128xf32>
    %cst_35 = arith.constant 0.000000e+00 : f32
    %93 = vector.broadcast %cst_35 : f32 to vector<1x128xf32>
    %94 = arith.maximumf %92, %93 : vector<1x128xf32>
    %cst_36 = arith.constant 9.99999974E-6 : f32
    %95 = vector.broadcast %cst_36 : f32 to vector<1x128xf32>
    %96 = arith.addf %94, %95 : vector<1x128xf32>
    %97 = math.rsqrt %96 : vector<1x128xf32>
    %98 = arith.mulf %76, %97 : vector<1x128xf32>
    %99 = arith.mulf %85, %98 : vector<1x128xf32>
    %100 = arith.subf %77, %99 : vector<1x128xf32>
    %101 = vector.broadcast %98 : vector<1x128xf32> to vector<8x128xf32>
    %102 = arith.mulf %81, %101 : vector<8x128xf32>
    %103 = vector.broadcast %100 : vector<1x128xf32> to vector<8x128xf32>
    %104 = arith.addf %102, %103 : vector<8x128xf32>
    %cst_37 = arith.constant 0.000000e+00 : f32
    %105 = vector.broadcast %cst_37 : f32 to vector<8x128xf32>
    %106 = arith.maximumf %104, %105 : vector<8x128xf32>
    %c1_38 = arith.constant 1 : index
    %c0_39 = arith.constant 0 : index
    %c0_40 = arith.constant 0 : index
    %107 = vector.load %arg5[%c1_38, %c0_39, %c0_40] : memref<6x128x128xbf16, #tpu.memory_space<vmem>>, vector<1x128x128xbf16>
    %108 = vector.shape_cast %107 : vector<1x128x128xbf16> to vector<128x128xbf16>
    %c3 = arith.constant 3 : index
    %c0_41 = arith.constant 0 : index
    %c0_42 = arith.constant 0 : index
    %109 = vector.load %arg1[%c3, %c0_41, %c0_42] : memref<9x3x256xf32, #tpu.memory_space<vmem>>, vector<1x3x256xf32>
    %110 = vector.shape_cast %109 : vector<1x3x256xf32> to vector<3x256xf32>
    %111 = vector.extract_strided_slice %110 {offsets = [0, 0], sizes = [1, 128], strides = [1, 1]} : vector<3x256xf32> to vector<1x128xf32>
    %112 = vector.extract_strided_slice %110 {offsets = [1, 0], sizes = [1, 128], strides = [1, 1]} : vector<3x256xf32> to vector<1x128xf32>
    %113 = vector.extract_strided_slice %110 {offsets = [2, 0], sizes = [1, 128], strides = [1, 1]} : vector<3x256xf32> to vector<1x128xf32>
    %114 = arith.truncf %106 : vector<8x128xf32> to vector<8x128xbf16>
    %cst_43 = arith.constant dense<0.000000e+00> : vector<8x128xf32>
    %115 = tpu.matmul %114, %108, %cst_43 {dimension_numbers = #tpu.dot_dimension_numbers<[1], [0], [0], [1], [0, 0, 1, 1], [], []>} : vector<8x128xbf16>, vector<128x128xbf16>, vector<8x128xf32> -> vector<8x128xf32>
    %116 = vector.broadcast %111 : vector<1x128xf32> to vector<8x128xf32>
    %117 = arith.addf %115, %116 : vector<8x128xf32>
    %cst_44 = arith.constant dense<0.000000e+00> : vector<128xf32>
    %118 = vector.multi_reduction <add>, %117, %cst_44 [0] : vector<8x128xf32> to vector<128xf32>
    %119 = vector.shape_cast %118 : vector<128xf32> to vector<1x128xf32>
    %cst_45 = arith.constant 8.000000e+00 : f32
    %120 = vector.broadcast %cst_45 : f32 to vector<1x128xf32>
    %121 = arith.divf %119, %120 : vector<1x128xf32>
    %122 = arith.mulf %117, %117 : vector<8x128xf32>
    %cst_46 = arith.constant dense<0.000000e+00> : vector<128xf32>
    %123 = vector.multi_reduction <add>, %122, %cst_46 [0] : vector<8x128xf32> to vector<128xf32>
    %124 = vector.shape_cast %123 : vector<128xf32> to vector<1x128xf32>
    %cst_47 = arith.constant 8.000000e+00 : f32
    %125 = vector.broadcast %cst_47 : f32 to vector<1x128xf32>
    %126 = arith.divf %124, %125 : vector<1x128xf32>
    %127 = arith.mulf %121, %121 : vector<1x128xf32>
    %128 = arith.subf %126, %127 : vector<1x128xf32>
    %cst_48 = arith.constant 0.000000e+00 : f32
    %129 = vector.broadcast %cst_48 : f32 to vector<1x128xf32>
    %130 = arith.maximumf %128, %129 : vector<1x128xf32>
    %cst_49 = arith.constant 9.99999974E-6 : f32
    %131 = vector.broadcast %cst_49 : f32 to vector<1x128xf32>
    %132 = arith.addf %130, %131 : vector<1x128xf32>
    %133 = math.rsqrt %132 : vector<1x128xf32>
    %134 = arith.mulf %112, %133 : vector<1x128xf32>
    %135 = arith.mulf %121, %134 : vector<1x128xf32>
    %136 = arith.subf %113, %135 : vector<1x128xf32>
    %137 = vector.broadcast %134 : vector<1x128xf32> to vector<8x128xf32>
    %138 = arith.mulf %117, %137 : vector<8x128xf32>
    %139 = vector.broadcast %136 : vector<1x128xf32> to vector<8x128xf32>
    %140 = arith.addf %138, %139 : vector<8x128xf32>
    %cst_50 = arith.constant 0.000000e+00 : f32
    %141 = vector.broadcast %cst_50 : f32 to vector<8x128xf32>
    %142 = arith.maximumf %140, %141 : vector<8x128xf32>
    %c2_51 = arith.constant 2 : index
    %c0_52 = arith.constant 0 : index
    %c0_53 = arith.constant 0 : index
    %143 = vector.load %arg5[%c2_51, %c0_52, %c0_53] : memref<6x128x128xbf16, #tpu.memory_space<vmem>>, vector<1x128x128xbf16>
    %144 = vector.shape_cast %143 : vector<1x128x128xbf16> to vector<128x128xbf16>
    %c4 = arith.constant 4 : index
    %c0_54 = arith.constant 0 : index
    %c0_55 = arith.constant 0 : index
    %145 = vector.load %arg1[%c4, %c0_54, %c0_55] : memref<9x3x256xf32, #tpu.memory_space<vmem>>, vector<1x3x256xf32>
    %146 = vector.shape_cast %145 : vector<1x3x256xf32> to vector<3x256xf32>
    %147 = vector.extract_strided_slice %146 {offsets = [0, 0], sizes = [1, 128], strides = [1, 1]} : vector<3x256xf32> to vector<1x128xf32>
    %148 = vector.extract_strided_slice %146 {offsets = [1, 0], sizes = [1, 128], strides = [1, 1]} : vector<3x256xf32> to vector<1x128xf32>
    %149 = vector.extract_strided_slice %146 {offsets = [2, 0], sizes = [1, 128], strides = [1, 1]} : vector<3x256xf32> to vector<1x128xf32>
    %150 = arith.truncf %142 : vector<8x128xf32> to vector<8x128xbf16>
    %cst_56 = arith.constant dense<0.000000e+00> : vector<8x128xf32>
    %151 = tpu.matmul %150, %144, %cst_56 {dimension_numbers = #tpu.dot_dimension_numbers<[1], [0], [0], [1], [0, 0, 1, 1], [], []>} : vector<8x128xbf16>, vector<128x128xbf16>, vector<8x128xf32> -> vector<8x128xf32>
    %152 = vector.broadcast %147 : vector<1x128xf32> to vector<8x128xf32>
    %153 = arith.addf %151, %152 : vector<8x128xf32>
    %cst_57 = arith.constant dense<0.000000e+00> : vector<128xf32>
    %154 = vector.multi_reduction <add>, %153, %cst_57 [0] : vector<8x128xf32> to vector<128xf32>
    %155 = vector.shape_cast %154 : vector<128xf32> to vector<1x128xf32>
    %cst_58 = arith.constant 8.000000e+00 : f32
    %156 = vector.broadcast %cst_58 : f32 to vector<1x128xf32>
    %157 = arith.divf %155, %156 : vector<1x128xf32>
    %158 = arith.mulf %153, %153 : vector<8x128xf32>
    %cst_59 = arith.constant dense<0.000000e+00> : vector<128xf32>
    %159 = vector.multi_reduction <add>, %158, %cst_59 [0] : vector<8x128xf32> to vector<128xf32>
    %160 = vector.shape_cast %159 : vector<128xf32> to vector<1x128xf32>
    %cst_60 = arith.constant 8.000000e+00 : f32
    %161 = vector.broadcast %cst_60 : f32 to vector<1x128xf32>
    %162 = arith.divf %160, %161 : vector<1x128xf32>
    %163 = arith.mulf %157, %157 : vector<1x128xf32>
    %164 = arith.subf %162, %163 : vector<1x128xf32>
    %cst_61 = arith.constant 0.000000e+00 : f32
    %165 = vector.broadcast %cst_61 : f32 to vector<1x128xf32>
    %166 = arith.maximumf %164, %165 : vector<1x128xf32>
    %cst_62 = arith.constant 9.99999974E-6 : f32
    %167 = vector.broadcast %cst_62 : f32 to vector<1x128xf32>
    %168 = arith.addf %166, %167 : vector<1x128xf32>
    %169 = math.rsqrt %168 : vector<1x128xf32>
    %170 = arith.mulf %148, %169 : vector<1x128xf32>
    %171 = arith.mulf %157, %170 : vector<1x128xf32>
    %172 = arith.subf %149, %171 : vector<1x128xf32>
    %173 = vector.broadcast %170 : vector<1x128xf32> to vector<8x128xf32>
    %174 = arith.mulf %153, %173 : vector<8x128xf32>
    %175 = vector.broadcast %172 : vector<1x128xf32> to vector<8x128xf32>
    %176 = arith.addf %174, %175 : vector<8x128xf32>
    %cst_63 = arith.constant 0.000000e+00 : f32
    %177 = vector.broadcast %cst_63 : f32 to vector<8x128xf32>
    %178 = arith.maximumf %176, %177 : vector<8x128xf32>
    %c0_64 = arith.constant 0 : index
    %c0_65 = arith.constant 0 : index
    %179 = vector.load %arg9[%c0_64, %c0_65] : memref<8x128xf32, #tpu.memory_space<vmem>>, vector<8x128xf32>
    tpu.vector_store %arg9[%c0_64, %c0_65], %178 {strides = array<i32>} : memref<8x128xf32, #tpu.memory_space<vmem>>, vector<8x128xf32>,
    %c3_66 = arith.constant 3 : index
    %c0_67 = arith.constant 0 : index
    %c0_68 = arith.constant 0 : index
    %180 = vector.load %arg5[%c3_66, %c0_67, %c0_68] : memref<6x128x128xbf16, #tpu.memory_space<vmem>>, vector<1x128x128xbf16>
    %181 = vector.shape_cast %180 : vector<1x128x128xbf16> to vector<128x128xbf16>
    %c5 = arith.constant 5 : index
    %c0_69 = arith.constant 0 : index
    %c0_70 = arith.constant 0 : index
    %182 = vector.load %arg1[%c5, %c0_69, %c0_70] : memref<9x3x256xf32, #tpu.memory_space<vmem>>, vector<1x3x256xf32>
    %183 = vector.shape_cast %182 : vector<1x3x256xf32> to vector<3x256xf32>
    %184 = vector.extract_strided_slice %183 {offsets = [0, 0], sizes = [1, 128], strides = [1, 1]} : vector<3x256xf32> to vector<1x128xf32>
    %185 = vector.extract_strided_slice %183 {offsets = [1, 0], sizes = [1, 128], strides = [1, 1]} : vector<3x256xf32> to vector<1x128xf32>
    %186 = vector.extract_strided_slice %183 {offsets = [2, 0], sizes = [1, 128], strides = [1, 1]} : vector<3x256xf32> to vector<1x128xf32>
    %187 = arith.truncf %178 : vector<8x128xf32> to vector<8x128xbf16>
    %cst_71 = arith.constant dense<0.000000e+00> : vector<8x128xf32>
    %188 = tpu.matmul %187, %181, %cst_71 {dimension_numbers = #tpu.dot_dimension_numbers<[1], [0], [0], [1], [0, 0, 1, 1], [], []>} : vector<8x128xbf16>, vector<128x128xbf16>, vector<8x128xf32> -> vector<8x128xf32>
    %189 = vector.broadcast %184 : vector<1x128xf32> to vector<8x128xf32>
    %190 = arith.addf %188, %189 : vector<8x128xf32>
    %cst_72 = arith.constant dense<0.000000e+00> : vector<128xf32>
    %191 = vector.multi_reduction <add>, %190, %cst_72 [0] : vector<8x128xf32> to vector<128xf32>
    %192 = vector.shape_cast %191 : vector<128xf32> to vector<1x128xf32>
    %cst_73 = arith.constant 8.000000e+00 : f32
    %193 = vector.broadcast %cst_73 : f32 to vector<1x128xf32>
    %194 = arith.divf %192, %193 : vector<1x128xf32>
    %195 = arith.mulf %190, %190 : vector<8x128xf32>
    %cst_74 = arith.constant dense<0.000000e+00> : vector<128xf32>
    %196 = vector.multi_reduction <add>, %195, %cst_74 [0] : vector<8x128xf32> to vector<128xf32>
    %197 = vector.shape_cast %196 : vector<128xf32> to vector<1x128xf32>
    %cst_75 = arith.constant 8.000000e+00 : f32
    %198 = vector.broadcast %cst_75 : f32 to vector<1x128xf32>
    %199 = arith.divf %197, %198 : vector<1x128xf32>
    %200 = arith.mulf %194, %194 : vector<1x128xf32>
    %201 = arith.subf %199, %200 : vector<1x128xf32>
    %cst_76 = arith.constant 0.000000e+00 : f32
    %202 = vector.broadcast %cst_76 : f32 to vector<1x128xf32>
    %203 = arith.maximumf %201, %202 : vector<1x128xf32>
    %cst_77 = arith.constant 9.99999974E-6 : f32
    %204 = vector.broadcast %cst_77 : f32 to vector<1x128xf32>
    %205 = arith.addf %203, %204 : vector<1x128xf32>
    %206 = math.rsqrt %205 : vector<1x128xf32>
    %207 = arith.mulf %185, %206 : vector<1x128xf32>
    %208 = arith.mulf %194, %207 : vector<1x128xf32>
    %209 = arith.subf %186, %208 : vector<1x128xf32>
    %210 = vector.broadcast %207 : vector<1x128xf32> to vector<8x128xf32>
    %211 = arith.mulf %190, %210 : vector<8x128xf32>
    %212 = vector.broadcast %209 : vector<1x128xf32> to vector<8x128xf32>
    %213 = arith.addf %211, %212 : vector<8x128xf32>
    %cst_78 = arith.constant 0.000000e+00 : f32
    %214 = vector.broadcast %cst_78 : f32 to vector<8x128xf32>
    %215 = arith.maximumf %213, %214 : vector<8x128xf32>
    %c4_79 = arith.constant 4 : index
    %c0_80 = arith.constant 0 : index
    %c0_81 = arith.constant 0 : index
    %216 = vector.load %arg5[%c4_79, %c0_80, %c0_81] : memref<6x128x128xbf16, #tpu.memory_space<vmem>>, vector<1x128x128xbf16>
    %217 = vector.shape_cast %216 : vector<1x128x128xbf16> to vector<128x128xbf16>
    %c6 = arith.constant 6 : index
    %c0_82 = arith.constant 0 : index
    %c0_83 = arith.constant 0 : index
    %218 = vector.load %arg1[%c6, %c0_82, %c0_83] : memref<9x3x256xf32, #tpu.memory_space<vmem>>, vector<1x3x256xf32>
    %219 = vector.shape_cast %218 : vector<1x3x256xf32> to vector<3x256xf32>
    %220 = vector.extract_strided_slice %219 {offsets = [0, 0], sizes = [1, 128], strides = [1, 1]} : vector<3x256xf32> to vector<1x128xf32>
    %221 = vector.extract_strided_slice %219 {offsets = [1, 0], sizes = [1, 128], strides = [1, 1]} : vector<3x256xf32> to vector<1x128xf32>
    %222 = vector.extract_strided_slice %219 {offsets = [2, 0], sizes = [1, 128], strides = [1, 1]} : vector<3x256xf32> to vector<1x128xf32>
    %223 = arith.truncf %215 : vector<8x128xf32> to vector<8x128xbf16>
    %cst_84 = arith.constant dense<0.000000e+00> : vector<8x128xf32>
    %224 = tpu.matmul %223, %217, %cst_84 {dimension_numbers = #tpu.dot_dimension_numbers<[1], [0], [0], [1], [0, 0, 1, 1], [], []>} : vector<8x128xbf16>, vector<128x128xbf16>, vector<8x128xf32> -> vector<8x128xf32>
    %225 = vector.broadcast %220 : vector<1x128xf32> to vector<8x128xf32>
    %226 = arith.addf %224, %225 : vector<8x128xf32>
    %cst_85 = arith.constant dense<0.000000e+00> : vector<128xf32>
    %227 = vector.multi_reduction <add>, %226, %cst_85 [0] : vector<8x128xf32> to vector<128xf32>
    %228 = vector.shape_cast %227 : vector<128xf32> to vector<1x128xf32>
    %cst_86 = arith.constant 8.000000e+00 : f32
    %229 = vector.broadcast %cst_86 : f32 to vector<1x128xf32>
    %230 = arith.divf %228, %229 : vector<1x128xf32>
    %231 = arith.mulf %226, %226 : vector<8x128xf32>
    %cst_87 = arith.constant dense<0.000000e+00> : vector<128xf32>
    %232 = vector.multi_reduction <add>, %231, %cst_87 [0] : vector<8x128xf32> to vector<128xf32>
    %233 = vector.shape_cast %232 : vector<128xf32> to vector<1x128xf32>
    %cst_88 = arith.constant 8.000000e+00 : f32
    %234 = vector.broadcast %cst_88 : f32 to vector<1x128xf32>
    %235 = arith.divf %233, %234 : vector<1x128xf32>
    %236 = arith.mulf %230, %230 : vector<1x128xf32>
    %237 = arith.subf %235, %236 : vector<1x128xf32>
    %cst_89 = arith.constant 0.000000e+00 : f32
    %238 = vector.broadcast %cst_89 : f32 to vector<1x128xf32>
    %239 = arith.maximumf %237, %238 : vector<1x128xf32>
    %cst_90 = arith.constant 9.99999974E-6 : f32
    %240 = vector.broadcast %cst_90 : f32 to vector<1x128xf32>
    %241 = arith.addf %239, %240 : vector<1x128xf32>
    %242 = math.rsqrt %241 : vector<1x128xf32>
    %243 = arith.mulf %221, %242 : vector<1x128xf32>
    %244 = arith.mulf %230, %243 : vector<1x128xf32>
    %245 = arith.subf %222, %244 : vector<1x128xf32>
    %246 = vector.broadcast %243 : vector<1x128xf32> to vector<8x128xf32>
    %247 = arith.mulf %226, %246 : vector<8x128xf32>
    %248 = vector.broadcast %245 : vector<1x128xf32> to vector<8x128xf32>
    %249 = arith.addf %247, %248 : vector<8x128xf32>
    %cst_91 = arith.constant 0.000000e+00 : f32
    %250 = vector.broadcast %cst_91 : f32 to vector<8x128xf32>
    %251 = arith.maximumf %249, %250 : vector<8x128xf32>
    %c5_92 = arith.constant 5 : index
    %c0_93 = arith.constant 0 : index
    %c0_94 = arith.constant 0 : index
    %252 = vector.load %arg5[%c5_92, %c0_93, %c0_94] : memref<6x128x128xbf16, #tpu.memory_space<vmem>>, vector<1x128x128xbf16>
    %253 = vector.shape_cast %252 : vector<1x128x128xbf16> to vector<128x128xbf16>
    %c7 = arith.constant 7 : index
    %c0_95 = arith.constant 0 : index
    %c0_96 = arith.constant 0 : index
    %254 = vector.load %arg1[%c7, %c0_95, %c0_96] : memref<9x3x256xf32, #tpu.memory_space<vmem>>, vector<1x3x256xf32>
    %255 = vector.shape_cast %254 : vector<1x3x256xf32> to vector<3x256xf32>
    %256 = vector.extract_strided_slice %255 {offsets = [0, 0], sizes = [1, 128], strides = [1, 1]} : vector<3x256xf32> to vector<1x128xf32>
    %257 = vector.extract_strided_slice %255 {offsets = [1, 0], sizes = [1, 128], strides = [1, 1]} : vector<3x256xf32> to vector<1x128xf32>
    %258 = vector.extract_strided_slice %255 {offsets = [2, 0], sizes = [1, 128], strides = [1, 1]} : vector<3x256xf32> to vector<1x128xf32>
    %259 = arith.truncf %251 : vector<8x128xf32> to vector<8x128xbf16>
    %cst_97 = arith.constant dense<0.000000e+00> : vector<8x128xf32>
    %260 = tpu.matmul %259, %253, %cst_97 {dimension_numbers = #tpu.dot_dimension_numbers<[1], [0], [0], [1], [0, 0, 1, 1], [], []>} : vector<8x128xbf16>, vector<128x128xbf16>, vector<8x128xf32> -> vector<8x128xf32>
    %261 = vector.broadcast %256 : vector<1x128xf32> to vector<8x128xf32>
    %262 = arith.addf %260, %261 : vector<8x128xf32>
    %cst_98 = arith.constant dense<0.000000e+00> : vector<128xf32>
    %263 = vector.multi_reduction <add>, %262, %cst_98 [0] : vector<8x128xf32> to vector<128xf32>
    %264 = vector.shape_cast %263 : vector<128xf32> to vector<1x128xf32>
    %cst_99 = arith.constant 8.000000e+00 : f32
    %265 = vector.broadcast %cst_99 : f32 to vector<1x128xf32>
    %266 = arith.divf %264, %265 : vector<1x128xf32>
    %267 = arith.mulf %262, %262 : vector<8x128xf32>
    %cst_100 = arith.constant dense<0.000000e+00> : vector<128xf32>
    %268 = vector.multi_reduction <add>, %267, %cst_100 [0] : vector<8x128xf32> to vector<128xf32>
    %269 = vector.shape_cast %268 : vector<128xf32> to vector<1x128xf32>
    %cst_101 = arith.constant 8.000000e+00 : f32
    %270 = vector.broadcast %cst_101 : f32 to vector<1x128xf32>
    %271 = arith.divf %269, %270 : vector<1x128xf32>
    %272 = arith.mulf %266, %266 : vector<1x128xf32>
    %273 = arith.subf %271, %272 : vector<1x128xf32>
    %cst_102 = arith.constant 0.000000e+00 : f32
    %274 = vector.broadcast %cst_102 : f32 to vector<1x128xf32>
    %275 = arith.maximumf %273, %274 : vector<1x128xf32>
    %cst_103 = arith.constant 9.99999974E-6 : f32
    %276 = vector.broadcast %cst_103 : f32 to vector<1x128xf32>
    %277 = arith.addf %275, %276 : vector<1x128xf32>
    %278 = math.rsqrt %277 : vector<1x128xf32>
    %279 = arith.mulf %257, %278 : vector<1x128xf32>
    %280 = arith.mulf %266, %279 : vector<1x128xf32>
    %281 = arith.subf %258, %280 : vector<1x128xf32>
    %282 = vector.broadcast %279 : vector<1x128xf32> to vector<8x128xf32>
    %283 = arith.mulf %262, %282 : vector<8x128xf32>
    %284 = vector.broadcast %281 : vector<1x128xf32> to vector<8x128xf32>
    %285 = arith.addf %283, %284 : vector<8x128xf32>
    %cst_104 = arith.constant 0.000000e+00 : f32
    %286 = vector.broadcast %cst_104 : f32 to vector<8x128xf32>
    %287 = arith.maximumf %285, %286 : vector<8x128xf32>
    %c0_105 = arith.constant 0 : index
    %c0_106 = arith.constant 0 : index
    %288 = vector.load %arg6[%c0_105, %c0_106] : memref<128x256xbf16, #tpu.memory_space<vmem>>, vector<128x256xbf16>
    %c8 = arith.constant 8 : index
    %c0_107 = arith.constant 0 : index
    %c0_108 = arith.constant 0 : index
    %289 = vector.load %arg1[%c8, %c0_107, %c0_108] : memref<9x3x256xf32, #tpu.memory_space<vmem>>, vector<1x3x256xf32>
    %290 = vector.shape_cast %289 : vector<1x3x256xf32> to vector<3x256xf32>
    %291 = vector.extract_strided_slice %290 {offsets = [0, 0], sizes = [1, 256], strides = [1, 1]} : vector<3x256xf32> to vector<1x256xf32>
    %292 = vector.extract_strided_slice %290 {offsets = [1, 0], sizes = [1, 256], strides = [1, 1]} : vector<3x256xf32> to vector<1x256xf32>
    %293 = vector.extract_strided_slice %290 {offsets = [2, 0], sizes = [1, 256], strides = [1, 1]} : vector<3x256xf32> to vector<1x256xf32>
    %294 = arith.truncf %287 : vector<8x128xf32> to vector<8x128xbf16>
    %cst_109 = arith.constant dense<0.000000e+00> : vector<8x256xf32>
    %295 = tpu.matmul %294, %288, %cst_109 {dimension_numbers = #tpu.dot_dimension_numbers<[1], [0], [0], [1], [0, 0, 1, 1], [], []>} : vector<8x128xbf16>, vector<128x256xbf16>, vector<8x256xf32> -> vector<8x256xf32>
    %296 = vector.broadcast %291 : vector<1x256xf32> to vector<8x256xf32>
    %297 = arith.addf %295, %296 : vector<8x256xf32>
    %cst_110 = arith.constant dense<0.000000e+00> : vector<256xf32>
    %298 = vector.multi_reduction <add>, %297, %cst_110 [0] : vector<8x256xf32> to vector<256xf32>
    %299 = vector.shape_cast %298 : vector<256xf32> to vector<1x256xf32>
    %cst_111 = arith.constant 8.000000e+00 : f32
    %300 = vector.broadcast %cst_111 : f32 to vector<1x256xf32>
    %301 = arith.divf %299, %300 : vector<1x256xf32>
    %302 = arith.mulf %297, %297 : vector<8x256xf32>
    %cst_112 = arith.constant dense<0.000000e+00> : vector<256xf32>
    %303 = vector.multi_reduction <add>, %302, %cst_112 [0] : vector<8x256xf32> to vector<256xf32>
    %304 = vector.shape_cast %303 : vector<256xf32> to vector<1x256xf32>
    %cst_113 = arith.constant 8.000000e+00 : f32
    %305 = vector.broadcast %cst_113 : f32 to vector<1x256xf32>
    %306 = arith.divf %304, %305 : vector<1x256xf32>
    %307 = arith.mulf %301, %301 : vector<1x256xf32>
    %308 = arith.subf %306, %307 : vector<1x256xf32>
    %cst_114 = arith.constant 0.000000e+00 : f32
    %309 = vector.broadcast %cst_114 : f32 to vector<1x256xf32>
    %310 = arith.maximumf %308, %309 : vector<1x256xf32>
    %cst_115 = arith.constant 9.99999974E-6 : f32
    %311 = vector.broadcast %cst_115 : f32 to vector<1x256xf32>
    %312 = arith.addf %310, %311 : vector<1x256xf32>
    %313 = math.rsqrt %312 : vector<1x256xf32>
    %314 = arith.mulf %292, %313 : vector<1x256xf32>
    %315 = arith.mulf %301, %314 : vector<1x256xf32>
    %316 = arith.subf %293, %315 : vector<1x256xf32>
    %317 = vector.broadcast %314 : vector<1x256xf32> to vector<8x256xf32>
    %318 = arith.mulf %297, %317 : vector<8x256xf32>
    %319 = vector.broadcast %316 : vector<1x256xf32> to vector<8x256xf32>
    %320 = arith.addf %318, %319 : vector<8x256xf32>
    %cst_116 = arith.constant 0.000000e+00 : f32
    %321 = vector.broadcast %cst_116 : f32 to vector<8x256xf32>
    %322 = arith.maximumf %320, %321 : vector<8x256xf32>
    tpu.wait_dma2 semaphore(%arg11 : memref<!tpu.dma_semaphore, #tpu.memory_space<semaphore_mem>>) src(%arg7 : memref<256x640xbf16, #tpu.memory_space<any>>) dst(%arg10 : memref<256x640xbf16, #tpu.memory_space<vmem>>)
    %323 = arith.truncf %322 : vector<8x256xf32> to vector<8x256xbf16>
    %c0_117 = arith.constant 0 : index
    %c0_118 = arith.constant 0 : index
    %324 = vector.load %arg10[%c0_117, %c0_118] : memref<256x640xbf16, #tpu.memory_space<vmem>>, vector<256x640xbf16>
    %cst_119 = arith.constant dense<0.000000e+00> : vector<8x640xf32>
    %325 = tpu.matmul %323, %324, %cst_119 {dimension_numbers = #tpu.dot_dimension_numbers<[1], [0], [0], [1], [0, 0, 1, 1], [], []>} : vector<8x256xbf16>, vector<256x640xbf16>, vector<8x640xf32> -> vector<8x640xf32>
    %c0_120 = arith.constant 0 : index
    %c0_121 = arith.constant 0 : index
    %326 = vector.load %arg2[%c0_120, %c0_121] : memref<1x640xf32, #tpu.memory_space<vmem>>, vector<1x640xf32>
    %327 = vector.broadcast %326 : vector<1x640xf32> to vector<8x640xf32>
    %328 = arith.addf %325, %327 : vector<8x640xf32>
    %c0_122 = arith.constant 0 : index
    %c0_123 = arith.constant 0 : index
    %329 = vector.load %arg8[%c0_122, %c0_123] : memref<8x640xf32, #tpu.memory_space<vmem>>, vector<8x640xf32>
    tpu.vector_store %arg8[%c0_122, %c0_123], %328 {strides = array<i32>} : memref<8x640xf32, #tpu.memory_space<vmem>>, vector<8x640xf32>,
    return
  }
}

</mosaic_0001>

<llo_original>
// kernel: auto_encoder_forward.1
$region0: #{auto_encoder_forward.1}
  #allocation0 [shape = 'u32[]', space=smem, size = 0x4, offset = 0x4, fixed_abs, tag = 'smem constant byte address 0x4 - core index']
  #allocation1 [shape = 'u32[144,128]{1,0:T(1,128)}', space=vmem, size = 0x12000, scoped, tag = 'internal scratch']
  #allocation2 [shape = 'bf16[256,640]{1,0:T(16,128)(2,1)}', space=vmem, size = 0x50000, scoped, tag = 'scratch operand']
  #allocation3 [shape = 's32[1]{0}', space=sflag, size = 0x4, scoped, tag = 'scratch operand']
  #allocation19 [shape = 's32[]', space=sflag, size = 0x4, offset = 0, fixed_abs, tag = 'sflag constant byte address 0x0 - dummy sync flag']
  %s0 = inlined_call_operand.hbm [shape: f32[8,640], index: 0, kind: input, shape index: {}]
  %s1 = inlined_call_operand.hbm [shape: f32[9,3,256], index: 1, kind: input, shape index: {}]
  %s2 = inlined_call_operand.hbm [shape: f32[1,640], index: 2, kind: input, shape index: {}]
  %s3 = inlined_call_operand.hbm [shape: bf16[640,256], index: 3, kind: input, shape index: {}]
  %s4 = inlined_call_operand.hbm [shape: bf16[256,128], index: 4, kind: input, shape index: {}]
  %s5 = inlined_call_operand.hbm [shape: bf16[6,128,128], index: 5, kind: input, shape index: {}]
  %s6 = inlined_call_operand.hbm [shape: bf16[128,256], index: 6, kind: input, shape index: {}]
  %s7 = inlined_call_operand.hbm [shape: bf16[256,640], index: 7, kind: input, shape index: {}]
  %s8 = inlined_call_operand.hbm [shape: f32[8,640], index: 8, kind: output, shape index: {0}]
  %s9 = inlined_call_operand.hbm [shape: f32[8,128], index: 9, kind: output, shape index: {1}]
  %10 = xla_tuple %s8, %s9
  %s11 = sld [smem:[#allocation0]]
  $region74: #{auto_encoder_forward.1} parent=0
    _
  %s13 = ssub.s32 1, %s11
  %s14 = scalar_select 0, %s13, %s11
  $region1: #{auto_encoder_forward.1} parent=0
    #allocation4 [shape = 'u8[20480]{0}', space=vmem, size = 0x5000, scoped, tag = 'input window, operand 0, single buffered']
    #allocation5 [shape = 's32[1]{0}', space=sflag, size = 0x4, scoped, tag = 'scoped memory for auto_encoder_forward.1']
    #allocation6 [shape = 's32[1]{0}', space=sflag, size = 0x4, scoped, tag = 'scoped memory for auto_encoder_forward.1']
    #allocation7 [shape = 'u8[36864]{0}', space=vmem, size = 0x9000, scoped, tag = 'input window, operand 1, single buffered']
    #allocation8 [shape = 's32[1]{0}', space=sflag, size = 0x4, scoped, tag = 'scoped memory for auto_encoder_forward.1']
    #allocation9 [shape = 'u8[2560]{0}', space=vmem, size = 0xc00, scoped, tag = 'input window, operand 2, single buffered']
    #allocation10 [shape = 'u8[327680]{0}', space=vmem, size = 0x50000, scoped, tag = 'input window, operand 3, single buffered']
    #allocation11 [shape = 's32[1]{0}', space=sflag, size = 0x4, scoped, tag = 'scoped memory for auto_encoder_forward.1']
    #allocation12 [shape = 'u8[65536]{0}', space=vmem, size = 0x10000, scoped, tag = 'input window, operand 4, single buffered']
    #allocation13 [shape = 'u8[196608]{0}', space=vmem, size = 0x30000, scoped, tag = 'input window, operand 5, single buffered']
    #allocation14 [shape = 's32[1]{0}', space=sflag, size = 0x4, scoped, tag = 'scoped memory for auto_encoder_forward.1']
    #allocation15 [shape = 'u8[65536]{0}', space=vmem, size = 0x10000, scoped, tag = 'input window, operand 6, single buffered']
    #allocation16 [shape = 'u8[20480]{0}', space=vmem, size = 0x5000, scoped, tag = 'output window, operand 0, single buffered']
    #allocation17 [shape = 'u8[4096]{0}', space=vmem, size = 0x1000, scoped, tag = 'output window, operand 1, single buffered']
    #allocation18 [shape = 's32[1]{0}', space=sflag, size = 0x4, scoped, tag = 'scoped memory for auto_encoder_forward.1']
    #allocation20 [shape = 'u32[9]{0}', space=smem, size = 0x24, scoped, tag = 'DMA stride descriptor']
    %15 = vsyncpa [#allocation5], 0
    %16 = vsyncpa [#allocation8], 0
    %17 = vsyncpa [#allocation11], 0
    %18 = vsyncpa [#allocation14], 0
    %19 = vsyncpa [#allocation6], 0
    %20 = vsyncpa [#allocation18], 0
    // Predicated region
    $region2: #{auto_encoder_forward.1} parent=1 // pred_check
      _
    $region3: #{auto_encoder_forward.1} parent=1 // pred_check_branch
      %22 = sbr.rel (0) target = $region5
    $region4: #{auto_encoder_forward.1} parent=1 // pred_region
      %s24 = ssub.s32 640, 640
      %25 = vsyncadd [#allocation5], %s24
      %s27 = sshll.u32 [#allocation4], 4
      %s28 = int_to_ptr.vmem [resolvable:$true] %s27
      %30 = dma.hbm_to_vmem [thread:$0]  %s0, 640, %s28, [#allocation5]
    $region5: #{auto_encoder_forward.1} parent=1 // pred_fallthru
      _
    // Predicated region
    $region6: #{auto_encoder_forward.1} parent=1 // pred_check
      _
    $region7: #{auto_encoder_forward.1} parent=1 // pred_check_branch
      %32 = sbr.rel (0) target = $region9
    $region8: #{auto_encoder_forward.1} parent=1 // pred_region
      %s34 = ssub.s32 1152, 1152
      %35 = vsyncadd [#allocation8], %s34
      %s36 = sshll.u32 [#allocation7], 4
      %s37 = int_to_ptr.vmem [resolvable:$true] %s36
      %42 = dma.hbm_to_vmem [thread:$0]  %s1, 1152, %s37, [#allocation8], 128, 128, 8
    $region9: #{auto_encoder_forward.1} parent=1 // pred_fallthru
      _
    // Predicated region
    $region10: #{auto_encoder_forward.1} parent=1 // pred_check
      _
    $region11: #{auto_encoder_forward.1} parent=1 // pred_check_branch
      %44 = sbr.rel (0) target = $region13
    $region12: #{auto_encoder_forward.1} parent=1 // pred_region
      %s46 = ssub.s32 80, 80
      %47 = vsyncadd [#allocation8], %s46
      %s49 = sshll.u32 [#allocation9], 4
      %s50 = int_to_ptr.vmem [resolvable:$true] %s49
      %52 = dma.hbm_to_vmem [thread:$0]  %s2, 80, %s50, [#allocation8]
    $region13: #{auto_encoder_forward.1} parent=1 // pred_fallthru
      _
    // Predicated region
    $region14: #{auto_encoder_forward.1} parent=1 // pred_check
      _
    $region15: #{auto_encoder_forward.1} parent=1 // pred_check_branch
      %54 = sbr.rel (0) target = $region17
    $region16: #{auto_encoder_forward.1} parent=1 // pred_region
      %s56 = ssub.s32 10240, 10240
      %57 = vsyncadd [#allocation11], %s56
      %s58 = sshll.u32 [#allocation10], 4
      %s59 = int_to_ptr.vmem [resolvable:$true] %s58
      %64 = dma.hbm_to_vmem [thread:$0]  %s3, 10240, %s59, [#allocation11], 128, 128, 8
    $region17: #{auto_encoder_forward.1} parent=1 // pred_fallthru
      _
    // Predicated region
    $region18: #{auto_encoder_forward.1} parent=1 // pred_check
      _
    $region19: #{auto_encoder_forward.1} parent=1 // pred_check_branch
      %66 = sbr.rel (0) target = $region21
    $region20: #{auto_encoder_forward.1} parent=1 // pred_region
      %s68 = ssub.s32 2048, 2048
      %69 = vsyncadd [#allocation11], %s68
      %s70 = sshll.u32 [#allocation12], 4
      %s71 = int_to_ptr.vmem [resolvable:$true] %s70
      %76 = dma.hbm_to_vmem [thread:$0]  %s4, 2048, %s71, [#allocation11], 64, 64, 4
    $region21: #{auto_encoder_forward.1} parent=1 // pred_fallthru
      _
    // Predicated region
    $region22: #{auto_encoder_forward.1} parent=1 // pred_check
      _
    $region23: #{auto_encoder_forward.1} parent=1 // pred_check_branch
      %78 = sbr.rel (0) target = $region25
    $region24: #{auto_encoder_forward.1} parent=1 // pred_region
      %s80 = ssub.s32 6144, 6144
      %81 = vsyncadd [#allocation14], %s80
      %s82 = sshll.u32 [#allocation13], 4
      %s83 = int_to_ptr.vmem [resolvable:$true] %s82
      %88 = dma.hbm_to_vmem [thread:$0]  %s5, 6144, %s83, [#allocation14], 64, 64, 4
    $region25: #{auto_encoder_forward.1} parent=1 // pred_fallthru
      _
    // Predicated region
    $region26: #{auto_encoder_forward.1} parent=1 // pred_check
      _
    $region27: #{auto_encoder_forward.1} parent=1 // pred_check_branch
      %90 = sbr.rel (0) target = $region29
    $region28: #{auto_encoder_forward.1} parent=1 // pred_region
      %s92 = ssub.s32 2048, 2048
      %93 = vsyncadd [#allocation14], %s92
      %s94 = sshll.u32 [#allocation15], 4
      %s95 = int_to_ptr.vmem [resolvable:$true] %s94
      %100 = dma.hbm_to_vmem [thread:$0]  %s6, 2048, %s95, [#allocation14], 128, 128, 8
    $region29: #{auto_encoder_forward.1} parent=1 // pred_fallthru
      _
    // Predicated region
    $region30: #{auto_encoder_forward.1} parent=1 // pred_check
      _
    $region31: #{auto_encoder_forward.1} parent=1 // pred_check_branch
      %102 = sbr.rel (0) target = $region33
    $region32: #{auto_encoder_forward.1} parent=1 // pred_region
      %103 = dma.done [#allocation5], 640
    $region33: #{auto_encoder_forward.1} parent=1 // pred_fallthru
      _
    // Predicated region
    $region34: #{auto_encoder_forward.1} parent=1 // pred_check
      _
    $region35: #{auto_encoder_forward.1} parent=1 // pred_check_branch
      %105 = sbr.rel (0) target = $region37
    $region36: #{auto_encoder_forward.1} parent=1 // pred_region
      %106 = dma.done [#allocation8], 1152
    $region37: #{auto_encoder_forward.1} parent=1 // pred_fallthru
      _
    // Predicated region
    $region38: #{auto_encoder_forward.1} parent=1 // pred_check
      _
    $region39: #{auto_encoder_forward.1} parent=1 // pred_check_branch
      %108 = sbr.rel (0) target = $region41
    $region40: #{auto_encoder_forward.1} parent=1 // pred_region
      %109 = dma.done [#allocation8], 80
    $region41: #{auto_encoder_forward.1} parent=1 // pred_fallthru
      _
    // Predicated region
    $region42: #{auto_encoder_forward.1} parent=1 // pred_check
      _
    $region43: #{auto_encoder_forward.1} parent=1 // pred_check_branch
      %111 = sbr.rel (0) target = $region45
    $region44: #{auto_encoder_forward.1} parent=1 // pred_region
      %112 = dma.done [#allocation11], 10240
    $region45: #{auto_encoder_forward.1} parent=1 // pred_fallthru
      _
    // Predicated region
    $region46: #{auto_encoder_forward.1} parent=1 // pred_check
      _
    $region47: #{auto_encoder_forward.1} parent=1 // pred_check_branch
      %114 = sbr.rel (0) target = $region49
    $region48: #{auto_encoder_forward.1} parent=1 // pred_region
      %115 = dma.done [#allocation11], 2048
    $region49: #{auto_encoder_forward.1} parent=1 // pred_fallthru
      _
    // Predicated region
    $region50: #{auto_encoder_forward.1} parent=1 // pred_check
      _
    $region51: #{auto_encoder_forward.1} parent=1 // pred_check_branch
      %117 = sbr.rel (0) target = $region53
    $region52: #{auto_encoder_forward.1} parent=1 // pred_region
      %118 = dma.done [#allocation14], 6144
    $region53: #{auto_encoder_forward.1} parent=1 // pred_fallthru
      _
    // Predicated region
    $region54: #{auto_encoder_forward.1} parent=1 // pred_check
      _
    $region55: #{auto_encoder_forward.1} parent=1 // pred_check_branch
      %120 = sbr.rel (0) target = $region57
    $region56: #{auto_encoder_forward.1} parent=1 // pred_region
      %121 = dma.done [#allocation14], 2048
    $region57: #{auto_encoder_forward.1} parent=1 // pred_fallthru
      _
    %s124 = sshll.u32 1, 14
    %s125 = sxor.u32 4294967295, %s124
    %s127 = sld [smem:[#allocation0]]
    %s128 = sadd.s32 2, %s127
    %s130 = sshll.u32 7, 26
    %s131 = sxor.u32 4294967295, %s130
    %s132 = sand.u32 0, %s131
    %s133 = sshll.u32 %s128, 26
    %s134 = sor.u32 %s132, %s133
    %s135 = sshll.u32 [#allocation2], 4
    %s136 = int_to_ptr.vmem [resolvable:$true] %s135
    %139 = sst [smem:[#allocation20]] 640
    %s140 = scalar_lea.smem [#allocation20], 1
    %141 = sst [smem:[%s140]] 640
    %s142 = scalar_lea.smem [#allocation20], 2
    %143 = sst [smem:[%s142]] 5
    %s144 = scalar_lea.smem [#allocation20], 3
    %145 = sst [smem:[%s144]] 64
    %s146 = scalar_lea.smem [#allocation20], 4
    %147 = sst [smem:[%s146]] 128
    %s148 = scalar_lea.smem [#allocation20], 5
    %149 = sst [smem:[%s148]] 2
    %s150 = scalar_lea.smem [#allocation20], 6
    %151 = sst [smem:[%s150]] 320
    %s152 = scalar_lea.smem [#allocation20], 7
    %153 = sst [smem:[%s152]] 64
    %s154 = scalar_lea.smem [#allocation20], 8
    %155 = sst [smem:[%s154]] 4
    %157 = dma.general %s7, 10240, %s136, [#allocation3], [#allocation19], [#allocation20], %s134, 0
    %v158 = vld [vmem:[#allocation4] sm:$0xff]
    %v159 = vld [vmem:[#allocation4 + $0x8] sm:$0xff]
    %v160 = vld [vmem:[#allocation4 + $0x10] sm:$0xff]
    %v161 = vld [vmem:[#allocation4 + $0x18] sm:$0xff]
    %v162 = vld [vmem:[#allocation4 + $0x20] sm:$0xff]
    %v163 = vld [vmem:[#allocation10] sm:$0xff]
    %v164 = vld [vmem:[#allocation10 + $0x8] sm:$0xff]
    %v165 = vld [vmem:[#allocation10 + $0x10] sm:$0xff]
    %v166 = vld [vmem:[#allocation10 + $0x18] sm:$0xff]
    %v167 = vld [vmem:[#allocation10 + $0x20] sm:$0xff]
    %v168 = vld [vmem:[#allocation10 + $0x28] sm:$0xff]
    %v169 = vld [vmem:[#allocation10 + $0x30] sm:$0xff]
    %v170 = vld [vmem:[#allocation10 + $0x38] sm:$0xff]
    %v171 = vld [vmem:[#allocation10 + $0x40] sm:$0xff]
    %v172 = vld [vmem:[#allocation10 + $0x48] sm:$0xff]
    %v173 = vld [vmem:[#allocation10 + $0x50] sm:$0xff]
    %v174 = vld [vmem:[#allocation10 + $0x58] sm:$0xff]
    %v175 = vld [vmem:[#allocation10 + $0x60] sm:$0xff]
    %v176 = vld [vmem:[#allocation10 + $0x68] sm:$0xff]
    %v177 = vld [vmem:[#allocation10 + $0x70] sm:$0xff]
    %v178 = vld [vmem:[#allocation10 + $0x78] sm:$0xff]
    %v179 = vld [vmem:[#allocation10 + $0x80] sm:$0xff]
    %v180 = vld [vmem:[#allocation10 + $0x88] sm:$0xff]
    %v181 = vld [vmem:[#allocation10 + $0x90] sm:$0xff]
    %v182 = vld [vmem:[#allocation10 + $0x98] sm:$0xff]
    %v183 = vld [vmem:[#allocation10 + $0xa0] sm:$0xff]
    %v184 = vld [vmem:[#allocation10 + $0xa8] sm:$0xff]
    %v185 = vld [vmem:[#allocation10 + $0xb0] sm:$0xff]
    %v186 = vld [vmem:[#allocation10 + $0xb8] sm:$0xff]
    %v187 = vld [vmem:[#allocation10 + $0xc0] sm:$0xff]
    %v188 = vld [vmem:[#allocation10 + $0xc8] sm:$0xff]
    %v189 = vld [vmem:[#allocation10 + $0xd0] sm:$0xff]
    %v190 = vld [vmem:[#allocation10 + $0xd8] sm:$0xff]
    %v191 = vld [vmem:[#allocation10 + $0xe0] sm:$0xff]
    %v192 = vld [vmem:[#allocation10 + $0xe8] sm:$0xff]
    %v193 = vld [vmem:[#allocation10 + $0xf0] sm:$0xff]
    %v194 = vld [vmem:[#allocation10 + $0xf8] sm:$0xff]
    %v195 = vld [vmem:[#allocation10 + $0x100] sm:$0xff]
    %v196 = vld [vmem:[#allocation10 + $0x108] sm:$0xff]
    %v197 = vld [vmem:[#allocation10 + $0x110] sm:$0xff]
    %v198 = vld [vmem:[#allocation10 + $0x118] sm:$0xff]
    %v199 = vld [vmem:[#allocation10 + $0x120] sm:$0xff]
    %v200 = vld [vmem:[#allocation10 + $0x128] sm:$0xff]
    %v201 = vld [vmem:[#allocation10 + $0x130] sm:$0xff]
    %v202 = vld [vmem:[#allocation10 + $0x138] sm:$0xff]
    %v203 = vld [vmem:[#allocation10 + $0x140] sm:$0xff]
    %v204 = vld [vmem:[#allocation10 + $0x148] sm:$0xff]
    %v205 = vld [vmem:[#allocation10 + $0x150] sm:$0xff]
    %v206 = vld [vmem:[#allocation10 + $0x158] sm:$0xff]
    %v207 = vld [vmem:[#allocation10 + $0x160] sm:$0xff]
    %v208 = vld [vmem:[#allocation10 + $0x168] sm:$0xff]
    %v209 = vld [vmem:[#allocation10 + $0x170] sm:$0xff]
    %v210 = vld [vmem:[#allocation10 + $0x178] sm:$0xff]
    %v211 = vld [vmem:[#allocation10 + $0x180] sm:$0xff]
    %v212 = vld [vmem:[#allocation10 + $0x188] sm:$0xff]
    %v213 = vld [vmem:[#allocation10 + $0x190] sm:$0xff]
    %v214 = vld [vmem:[#allocation10 + $0x198] sm:$0xff]
    %v215 = vld [vmem:[#allocation10 + $0x1a0] sm:$0xff]
    %v216 = vld [vmem:[#allocation10 + $0x1a8] sm:$0xff]
    %v217 = vld [vmem:[#allocation10 + $0x1b0] sm:$0xff]
    %v218 = vld [vmem:[#allocation10 + $0x1b8] sm:$0xff]
    %v219 = vld [vmem:[#allocation10 + $0x1c0] sm:$0xff]
    %v220 = vld [vmem:[#allocation10 + $0x1c8] sm:$0xff]
    %v221 = vld [vmem:[#allocation10 + $0x1d0] sm:$0xff]
    %v222 = vld [vmem:[#allocation10 + $0x1d8] sm:$0xff]
    %v223 = vld [vmem:[#allocation10 + $0x1e0] sm:$0xff]
    %v224 = vld [vmem:[#allocation10 + $0x1e8] sm:$0xff]
    %v225 = vld [vmem:[#allocation10 + $0x1f0] sm:$0xff]
    %v226 = vld [vmem:[#allocation10 + $0x1f8] sm:$0xff]
    %v227 = vld [vmem:[#allocation10 + $0x200] sm:$0xff]
    %v228 = vld [vmem:[#allocation10 + $0x208] sm:$0xff]
    %v229 = vld [vmem:[#allocation10 + $0x210] sm:$0xff]
    %v230 = vld [vmem:[#allocation10 + $0x218] sm:$0xff]
    %v231 = vld [vmem:[#allocation10 + $0x220] sm:$0xff]
    %v232 = vld [vmem:[#allocation10 + $0x228] sm:$0xff]
    %v233 = vld [vmem:[#allocation10 + $0x230] sm:$0xff]
    %v234 = vld [vmem:[#allocation10 + $0x238] sm:$0xff]
    %v235 = vld [vmem:[#allocation10 + $0x240] sm:$0xff]
    %v236 = vld [vmem:[#allocation10 + $0x248] sm:$0xff]
    %v237 = vld [vmem:[#allocation10 + $0x250] sm:$0xff]
    %v238 = vld [vmem:[#allocation10 + $0x258] sm:$0xff]
    %v239 = vld [vmem:[#allocation10 + $0x260] sm:$0xff]
    %v240 = vld [vmem:[#allocation10 + $0x268] sm:$0xff]
    %v241 = vld [vmem:[#allocation10 + $0x270] sm:$0xff]
    %v242 = vld [vmem:[#allocation10 + $0x278] sm:$0xff]
    %v243 = vld [vmem:[#allocation7] sm:$0x77]
    %v244 = vpack.c.bf16 %v158, %v158
    %v245 = vpack.c.bf16 %v159, %v159
    %v246 = vpack.c.bf16 %v160, %v160
    %v247 = vpack.c.bf16 %v161, %v161
    %v248 = vpack.c.bf16 %v162, %v162
    %v250 = vlaneseq
    %v251 = vshrl.u32 %v250, 7
    %v252 = vsub.s32 0, %v251
    %v253 = vrot.slane %v243, %v252
    %v254 = vlaneseq
    %v255 = vshrl.u32 %v254, 7
    %v256 = vsub.s32 4, %v255
    %v257 = vrot.slane %v243, %v256
    %v260 = vlaneseq
    %v261 = vshrl.u32 %v260, 7
    %v262 = vsub.s32 0, %v261
    %v263 = vrot.slane %v253, %v262
    %v264 = vlaneseq
    %v265 = vshrl.u32 %v264, 7
    %v266 = vsub.s32 0, %v265
    %v267 = vrot.slane %v257, %v266
    %v348 = vunpack.c.l.b16 %v163
    %v349 = vunpack.c.h.b16 %v163
    %v350 = vunpack.c.l.b16 %v164
    %v351 = vunpack.c.h.b16 %v164
    %v352 = vunpack.c.l.b16 %v165
    %v353 = vunpack.c.h.b16 %v165
    %v354 = vunpack.c.l.b16 %v166
    %v355 = vunpack.c.h.b16 %v166
    %v356 = vunpack.c.l.b16 %v167
    %v357 = vunpack.c.h.b16 %v167
    %v358 = vunpack.c.l.b16 %v168
    %v359 = vunpack.c.h.b16 %v168
    %v360 = vunpack.c.l.b16 %v169
    %v361 = vunpack.c.h.b16 %v169
    %v362 = vunpack.c.l.b16 %v170
    %v363 = vunpack.c.h.b16 %v170
    %v364 = vunpack.c.l.b16 %v171
    %v365 = vunpack.c.h.b16 %v171
    %v366 = vunpack.c.l.b16 %v172
    %v367 = vunpack.c.h.b16 %v172
    %v368 = vunpack.c.l.b16 %v173
    %v369 = vunpack.c.h.b16 %v173
    %v370 = vunpack.c.l.b16 %v174
    %v371 = vunpack.c.h.b16 %v174
    %v372 = vunpack.c.l.b16 %v175
    %v373 = vunpack.c.h.b16 %v175
    %v374 = vunpack.c.l.b16 %v176
    %v375 = vunpack.c.h.b16 %v176
    %v376 = vunpack.c.l.b16 %v177
    %v377 = vunpack.c.h.b16 %v177
    %v378 = vunpack.c.l.b16 %v178
    %v379 = vunpack.c.h.b16 %v178
    %v380 = vunpack.c.l.b16 %v179
    %v381 = vunpack.c.h.b16 %v179
    %v382 = vunpack.c.l.b16 %v180
    %v383 = vunpack.c.h.b16 %v180
    %v384 = vunpack.c.l.b16 %v181
    %v385 = vunpack.c.h.b16 %v181
    %v386 = vunpack.c.l.b16 %v182
    %v387 = vunpack.c.h.b16 %v182
    %v388 = vunpack.c.l.b16 %v183
    %v389 = vunpack.c.h.b16 %v183
    %v390 = vunpack.c.l.b16 %v184
    %v391 = vunpack.c.h.b16 %v184
    %v392 = vunpack.c.l.b16 %v185
    %v393 = vunpack.c.h.b16 %v185
    %v394 = vunpack.c.l.b16 %v186
    %v395 = vunpack.c.h.b16 %v186
    %v396 = vunpack.c.l.b16 %v187
    %v397 = vunpack.c.h.b16 %v187
    %v398 = vunpack.c.l.b16 %v188
    %v399 = vunpack.c.h.b16 %v188
    %v400 = vunpack.c.l.b16 %v189
    %v401 = vunpack.c.h.b16 %v189
    %v402 = vunpack.c.l.b16 %v190
    %v403 = vunpack.c.h.b16 %v190
    %v404 = vunpack.c.l.b16 %v191
    %v405 = vunpack.c.h.b16 %v191
    %v406 = vunpack.c.l.b16 %v192
    %v407 = vunpack.c.h.b16 %v192
    %v408 = vunpack.c.l.b16 %v193
    %v409 = vunpack.c.h.b16 %v193
    %v410 = vunpack.c.l.b16 %v194
    %v411 = vunpack.c.h.b16 %v194
    %v412 = vunpack.c.l.b16 %v195
    %v413 = vunpack.c.h.b16 %v195
    %v414 = vunpack.c.l.b16 %v196
    %v415 = vunpack.c.h.b16 %v196
    %v416 = vunpack.c.l.b16 %v197
    %v417 = vunpack.c.h.b16 %v197
    %v418 = vunpack.c.l.b16 %v198
    %v419 = vunpack.c.h.b16 %v198
    %v420 = vunpack.c.l.b16 %v199
    %v421 = vunpack.c.h.b16 %v199
    %v422 = vunpack.c.l.b16 %v200
    %v423 = vunpack.c.h.b16 %v200
    %v424 = vunpack.c.l.b16 %v201
    %v425 = vunpack.c.h.b16 %v201
    %v426 = vunpack.c.l.b16 %v202
    %v427 = vunpack.c.h.b16 %v202
    %v428 = vunpack.c.l.b16 %v203
    %v429 = vunpack.c.h.b16 %v203
    %v430 = vunpack.c.l.b16 %v204
    %v431 = vunpack.c.h.b16 %v204
    %v432 = vunpack.c.l.b16 %v205
    %v433 = vunpack.c.h.b16 %v205
    %v434 = vunpack.c.l.b16 %v206
    %v435 = vunpack.c.h.b16 %v206
    %v436 = vunpack.c.l.b16 %v207
    %v437 = vunpack.c.h.b16 %v207
    %v438 = vunpack.c.l.b16 %v208
    %v439 = vunpack.c.h.b16 %v208
    %v440 = vunpack.c.l.b16 %v209
    %v441 = vunpack.c.h.b16 %v209
    %v442 = vunpack.c.l.b16 %v210
    %v443 = vunpack.c.h.b16 %v210
    %v444 = vunpack.c.l.b16 %v211
    %v445 = vunpack.c.h.b16 %v211
    %v446 = vunpack.c.l.b16 %v212
    %v447 = vunpack.c.h.b16 %v212
    %v448 = vunpack.c.l.b16 %v213
    %v449 = vunpack.c.h.b16 %v213
    %v450 = vunpack.c.l.b16 %v214
    %v451 = vunpack.c.h.b16 %v214
    %v452 = vunpack.c.l.b16 %v215
    %v453 = vunpack.c.h.b16 %v215
    %v454 = vunpack.c.l.b16 %v216
    %v455 = vunpack.c.h.b16 %v216
    %v456 = vunpack.c.l.b16 %v217
    %v457 = vunpack.c.h.b16 %v217
    %v458 = vunpack.c.l.b16 %v218
    %v459 = vunpack.c.h.b16 %v218
    %v460 = vunpack.c.l.b16 %v219
    %v461 = vunpack.c.h.b16 %v219
    %v462 = vunpack.c.l.b16 %v220
    %v463 = vunpack.c.h.b16 %v220
    %v464 = vunpack.c.l.b16 %v221
    %v465 = vunpack.c.h.b16 %v221
    %v466 = vunpack.c.l.b16 %v222
    %v467 = vunpack.c.h.b16 %v222
    %v468 = vunpack.c.l.b16 %v223
    %v469 = vunpack.c.h.b16 %v223
    %v470 = vunpack.c.l.b16 %v224
    %v471 = vunpack.c.h.b16 %v224
    %v472 = vunpack.c.l.b16 %v225
    %v473 = vunpack.c.h.b16 %v225
    %v474 = vunpack.c.l.b16 %v226
    %v475 = vunpack.c.h.b16 %v226
    %v476 = vunpack.c.l.b16 %v227
    %v477 = vunpack.c.h.b16 %v227
    %v478 = vunpack.c.l.b16 %v228
    %v479 = vunpack.c.h.b16 %v228
    %v480 = vunpack.c.l.b16 %v229
    %v481 = vunpack.c.h.b16 %v229
    %v482 = vunpack.c.l.b16 %v230
    %v483 = vunpack.c.h.b16 %v230
    %v484 = vunpack.c.l.b16 %v231
    %v485 = vunpack.c.h.b16 %v231
    %v486 = vunpack.c.l.b16 %v232
    %v487 = vunpack.c.h.b16 %v232
    %v488 = vunpack.c.l.b16 %v233
    %v489 = vunpack.c.h.b16 %v233
    %v490 = vunpack.c.l.b16 %v234
    %v491 = vunpack.c.h.b16 %v234
    %v492 = vunpack.c.l.b16 %v235
    %v493 = vunpack.c.h.b16 %v235
    %v494 = vunpack.c.l.b16 %v236
    %v495 = vunpack.c.h.b16 %v236
    %v496 = vunpack.c.l.b16 %v237
    %v497 = vunpack.c.h.b16 %v237
    %v498 = vunpack.c.l.b16 %v238
    %v499 = vunpack.c.h.b16 %v238
    %v500 = vunpack.c.l.b16 %v239
    %v501 = vunpack.c.h.b16 %v239
    %v502 = vunpack.c.l.b16 %v240
    %v503 = vunpack.c.h.b16 %v240
    %v504 = vunpack.c.l.b16 %v241
    %v505 = vunpack.c.h.b16 %v241
    %v506 = vunpack.c.l.b16 %v242
    %v507 = vunpack.c.h.b16 %v242
    %v508 = vpack.c.b16 %v350, %v348
    %v509 = vpack.c.b16 %v351, %v349
    %v510 = vpack.c.b16 %v354, %v352
    %v511 = vpack.c.b16 %v355, %v353
    %v512 = vpack.c.b16 %v358, %v356
    %v513 = vpack.c.b16 %v359, %v357
    %v514 = vpack.c.b16 %v362, %v360
    %v515 = vpack.c.b16 %v363, %v361
    %v516 = vpack.c.b16 %v366, %v364
    %v517 = vpack.c.b16 %v367, %v365
    %v518 = vpack.c.b16 %v370, %v368
    %v519 = vpack.c.b16 %v371, %v369
    %v520 = vpack.c.b16 %v374, %v372
    %v521 = vpack.c.b16 %v375, %v373
    %v522 = vpack.c.b16 %v378, %v376
    %v523 = vpack.c.b16 %v379, %v377
    %v524 = vpack.c.b16 %v382, %v380
    %v525 = vpack.c.b16 %v383, %v381
    %v526 = vpack.c.b16 %v386, %v384
    %v527 = vpack.c.b16 %v387, %v385
    %v528 = vpack.c.b16 %v390, %v388
    %v529 = vpack.c.b16 %v391, %v389
    %v530 = vpack.c.b16 %v394, %v392
    %v531 = vpack.c.b16 %v395, %v393
    %v532 = vpack.c.b16 %v398, %v396
    %v533 = vpack.c.b16 %v399, %v397
    %v534 = vpack.c.b16 %v402, %v400
    %v535 = vpack.c.b16 %v403, %v401
    %v536 = vpack.c.b16 %v406, %v404
    %v537 = vpack.c.b16 %v407, %v405
    %v538 = vpack.c.b16 %v410, %v408
    %v539 = vpack.c.b16 %v411, %v409
    %v540 = vpack.c.b16 %v414, %v412
    %v541 = vpack.c.b16 %v415, %v413
    %v542 = vpack.c.b16 %v418, %v416
    %v543 = vpack.c.b16 %v419, %v417
    %v544 = vpack.c.b16 %v422, %v420
    %v545 = vpack.c.b16 %v423, %v421
    %v546 = vpack.c.b16 %v426, %v424
    %v547 = vpack.c.b16 %v427, %v425
    %v548 = vpack.c.b16 %v430, %v428
    %v549 = vpack.c.b16 %v431, %v429
    %v550 = vpack.c.b16 %v434, %v432
    %v551 = vpack.c.b16 %v435, %v433
    %v552 = vpack.c.b16 %v438, %v436
    %v553 = vpack.c.b16 %v439, %v437
    %v554 = vpack.c.b16 %v442, %v440
    %v555 = vpack.c.b16 %v443, %v441
    %v556 = vpack.c.b16 %v446, %v444
    %v557 = vpack.c.b16 %v447, %v445
    %v558 = vpack.c.b16 %v450, %v448
    %v559 = vpack.c.b16 %v451, %v449
    %v560 = vpack.c.b16 %v454, %v452
    %v561 = vpack.c.b16 %v455, %v453
    %v562 = vpack.c.b16 %v458, %v456
    %v563 = vpack.c.b16 %v459, %v457
    %v564 = vpack.c.b16 %v462, %v460
    %v565 = vpack.c.b16 %v463, %v461
    %v566 = vpack.c.b16 %v466, %v464
    %v567 = vpack.c.b16 %v467, %v465
    %v568 = vpack.c.b16 %v470, %v468
    %v569 = vpack.c.b16 %v471, %v469
    %v570 = vpack.c.b16 %v474, %v472
    %v571 = vpack.c.b16 %v475, %v473
    %v572 = vpack.c.b16 %v478, %v476
    %v573 = vpack.c.b16 %v479, %v477
    %v574 = vpack.c.b16 %v482, %v480
    %v575 = vpack.c.b16 %v483, %v481
    %v576 = vpack.c.b16 %v486, %v484
    %v577 = vpack.c.b16 %v487, %v485
    %v578 = vpack.c.b16 %v490, %v488
    %v579 = vpack.c.b16 %v491, %v489
    %v580 = vpack.c.b16 %v494, %v492
    %v581 = vpack.c.b16 %v495, %v493
    %v582 = vpack.c.b16 %v498, %v496
    %v583 = vpack.c.b16 %v499, %v497
    %v584 = vpack.c.b16 %v502, %v500
    %v585 = vpack.c.b16 %v503, %v501
    %v586 = vpack.c.b16 %v506, %v504
    %v587 = vpack.c.b16 %v507, %v505
    %668 = vmatprep.subr.bf16.mxu0 %v509
    %669 = vmatpush1.bf16.msra.mxu0 %v508
    %670 = vmatprep.subr.bf16.mxu0 %v511
    %671 = vmatpush1.bf16.msra.mxu0 %v510
    %672 = vmatprep.subr.bf16.mxu0 %v513
    %673 = vmatpush1.bf16.msra.mxu0 %v512
    %674 = vmatprep.subr.bf16.mxu0 %v515
    %675 = vmatpush1.bf16.msra.mxu0 %v514
    %676 = vmatprep.subr.bf16.mxu0 %v517
    %677 = vmatpush1.bf16.msra.mxu0 %v516
    %678 = vmatprep.subr.bf16.mxu0 %v519
    %679 = vmatpush1.bf16.msra.mxu0 %v518
    %680 = vmatprep.subr.bf16.mxu0 %v521
    %681 = vmatpush1.bf16.msra.mxu0 %v520
    %682 = vmatprep.subr.bf16.mxu0 %v523
    %683 = vmatpush1.bf16.msra.mxu0 %v522
    %684 = vmatprep.subr.bf16.mxu0 %v525
    %685 = vmatpush1.bf16.msra.mxu0 %v524
    %686 = vmatprep.subr.bf16.mxu0 %v527
    %687 = vmatpush1.bf16.msra.mxu0 %v526
    %688 = vmatprep.subr.bf16.mxu0 %v529
    %689 = vmatpush1.bf16.msra.mxu0 %v528
    %690 = vmatprep.subr.bf16.mxu0 %v531
    %691 = vmatpush1.bf16.msra.mxu0 %v530
    %692 = vmatprep.subr.bf16.mxu0 %v533
    %693 = vmatpush1.bf16.msra.mxu0 %v532
    %694 = vmatprep.subr.bf16.mxu0 %v535
    %695 = vmatpush1.bf16.msra.mxu0 %v534
    %696 = vmatprep.subr.bf16.mxu0 %v537
    %697 = vmatpush1.bf16.msra.mxu0 %v536
    %698 = vmatprep.subr.bf16.mxu0 %v539
    %699 = vmatpush1.bf16.msra.mxu0 %v538
    %700 = vmatprep.mubr.bf16.mxu0 %v245
    %701 = vmatmul.mubr.bf16.gmra.mrb[0].mxu0 %v244
    %v702 = vpop.f32.mrb[0].mxu0
    %v703 = vadd.f32 %v263, %v702
    %v704 = vpop.f32.mrb[0].mxu0
    %v705 = vadd.f32 %v267, %v704
    %v706 = vpop.f32.mrb[0].mxu0
    %v707 = vpop.f32.mrb[0].mxu0
    %708 = vdwg.mxu0
    %709 = vmatprep.subr.bf16.mxu0 %v541
    %710 = vmatpush1.bf16.msra.mxu0 %v540
    %711 = vmatprep.subr.bf16.mxu0 %v543
    %712 = vmatpush1.bf16.msra.mxu0 %v542
    %713 = vmatprep.subr.bf16.mxu0 %v545
    %714 = vmatpush1.bf16.msra.mxu0 %v544
    %715 = vmatprep.subr.bf16.mxu0 %v547
    %716 = vmatpush1.bf16.msra.mxu0 %v546
    %717 = vmatprep.subr.bf16.mxu0 %v549
    %718 = vmatpush1.bf16.msra.mxu0 %v548
    %719 = vmatprep.subr.bf16.mxu0 %v551
    %720 = vmatpush1.bf16.msra.mxu0 %v550
    %721 = vmatprep.subr.bf16.mxu0 %v553
    %722 = vmatpush1.bf16.msra.mxu0 %v552
    %723 = vmatprep.subr.bf16.mxu0 %v555
    %724 = vmatpush1.bf16.msra.mxu0 %v554
    %725 = vmatprep.subr.bf16.mxu0 %v557
    %726 = vmatpush1.bf16.msra.mxu0 %v556
    %727 = vmatprep.subr.bf16.mxu0 %v559
    %728 = vmatpush1.bf16.msra.mxu0 %v558
    %729 = vmatprep.subr.bf16.mxu0 %v561
    %730 = vmatpush1.bf16.msra.mxu0 %v560
    %731 = vmatprep.subr.bf16.mxu0 %v563
    %732 = vmatpush1.bf16.msra.mxu0 %v562
    %733 = vmatprep.subr.bf16.mxu0 %v565
    %734 = vmatpush1.bf16.msra.mxu0 %v564
    %735 = vmatprep.subr.bf16.mxu0 %v567
    %736 = vmatpush1.bf16.msra.mxu0 %v566
    %737 = vmatprep.subr.bf16.mxu0 %v569
    %738 = vmatpush1.bf16.msra.mxu0 %v568
    %739 = vmatprep.subr.bf16.mxu0 %v571
    %740 = vmatpush1.bf16.msra.mxu0 %v570
    %741 = vmatprep.mubr.bf16.mxu0 %v247
    %742 = vmatmul.mubr.bf16.gmra.mrb[0].mxu0 %v246
    %v743 = vpop.f32.mrb[0].mxu0
    %v744 = vadd.f32 %v703, %v743
    %v745 = vpop.f32.mrb[0].mxu0
    %v746 = vadd.f32 %v705, %v745
    %v747 = vpop.f32.mrb[0].mxu0
    %v748 = vpop.f32.mrb[0].mxu0
    %749 = vdwg.mxu0
    %750 = vmatprep.subr.bf16.mxu0 %v573
    %751 = vmatpush1.bf16.msra.mxu0 %v572
    %752 = vmatprep.subr.bf16.mxu0 %v575
    %753 = vmatpush1.bf16.msra.mxu0 %v574
    %754 = vmatprep.subr.bf16.mxu0 %v577
    %755 = vmatpush1.bf16.msra.mxu0 %v576
    %756 = vmatprep.subr.bf16.mxu0 %v579
    %757 = vmatpush1.bf16.msra.mxu0 %v578
    %758 = vmatprep.subr.bf16.mxu0 %v581
    %759 = vmatpush1.bf16.msra.mxu0 %v580
    %760 = vmatprep.subr.bf16.mxu0 %v583
    %761 = vmatpush1.bf16.msra.mxu0 %v582
    %762 = vmatprep.subr.bf16.mxu0 %v585
    %763 = vmatpush1.bf16.msra.mxu0 %v584
    %764 = vmatprep.subr.bf16.mxu0 %v587
    %765 = vmatpush1.bf16.msra.mxu0 %v586
    %766 = vmatprep.subr.bf16.mxu0 0
    %767 = vmatpush1.bf16.msra.mxu0 0
    %768 = vmatprep.subr.bf16.mxu0 0
    %769 = vmatpush1.bf16.msra.mxu0 0
    %770 = vmatprep.subr.bf16.mxu0 0
    %771 = vmatpush1.bf16.msra.mxu0 0
    %772 = vmatprep.subr.bf16.mxu0 0
    %773 = vmatpush1.bf16.msra.mxu0 0
    %774 = vmatprep.subr.bf16.mxu0 0
    %775 = vmatpush1.bf16.msra.mxu0 0
    %776 = vmatprep.subr.bf16.mxu0 0
    %777 = vmatpush1.bf16.msra.mxu0 0
    %778 = vmatprep.subr.bf16.mxu0 0
    %779 = vmatpush1.bf16.msra.mxu0 0
    %780 = vmatprep.subr.bf16.mxu0 0
    %781 = vmatpush1.bf16.msra.mxu0 0
    %782 = vmatprep.mubr.bf16.mxu0 0
    %783 = vmatmul.mubr.bf16.gmra.mrb[0].mxu0 %v248
    %v784 = vpop.f32.mrb[0].mxu0
    %v785 = vadd.f32 %v744, %v784
    %v786 = vpop.f32.mrb[0].mxu0
    %v787 = vadd.f32 %v746, %v786
    %v788 = vpop.f32.mrb[0].mxu0
    %v789 = vpop.f32.mrb[0].mxu0
    %790 = vdwg.mxu0
    %v791 = vrot.slane %v785, 4
    %v792 = vadd.f32 %v785, %v791
    %v793 = vrot.slane %v792, 2
    %v794 = vadd.f32 %v792, %v793
    %v795 = vrot.slane %v794, 1
    %v796 = vadd.f32 %v794, %v795
    %v797 = vrot.slane %v787, 4
    %v798 = vadd.f32 %v787, %v797
    %v799 = vrot.slane %v798, 2
    %v800 = vadd.f32 %v798, %v799
    %v801 = vrot.slane %v800, 1
    %v802 = vadd.f32 %v800, %v801
    %v803 = vrcp.pop 8.0
    %v804 = vmul.f32 %v796, %v803
    %v805 = vmul.f32 %v802, %v803
    %v806 = vmul.f32 %v785, %v785
    %v807 = vmul.f32 %v787, %v787
    %v808 = vrot.slane %v806, 4
    %v809 = vadd.f32 %v806, %v808
    %v810 = vrot.slane %v809, 2
    %v811 = vadd.f32 %v809, %v810
    %v812 = vrot.slane %v811, 1
    %v813 = vadd.f32 %v811, %v812
    %v814 = vrot.slane %v807, 4
    %v815 = vadd.f32 %v807, %v814
    %v816 = vrot.slane %v815, 2
    %v817 = vadd.f32 %v815, %v816
    %v818 = vrot.slane %v817, 1
    %v819 = vadd.f32 %v817, %v818
    %v820 = vmul.f32 %v813, %v803
    %v821 = vmul.f32 %v819, %v803
    %v822 = vmul.f32 %v804, %v804
    %v823 = vmul.f32 %v805, %v805
    %v824 = vsub.f32 %v820, %v822
    %v825 = vsub.f32 %v821, %v823
    %v826 = vmax.f32 %v824, 0.0
    %v827 = vmax.f32 %v825, 0.0
    %v828 = vadd.f32 %v826, 1e-05
    %v829 = vadd.f32 %v827, 1e-05
    %v830 = vrsqrt.pop %v828
    %v831 = vrsqrt.pop %v829
    %v834 = vcombine.low %v830, %v831
    %v835 = vrot.slane %v834, 7
    %v837 = vmul.f32 %v243, %v835
    %v839 = vlaneseq
    %v840 = vshrl.u32 %v839, 7
    %v841 = vsub.s32 1, %v840
    %v842 = vrot.slane %v837, %v841
    %v843 = vlaneseq
    %v844 = vshrl.u32 %v843, 7
    %v845 = vsub.s32 5, %v844
    %v846 = vrot.slane %v837, %v845
    %v849 = vmul.f32 %v804, %v842
    %v850 = vmul.f32 %v805, %v846
    %v853 = vcombine.low %v849, %v850
    %v854 = vrot.slane %v853, 6
    %v856 = vsub.f32 %v243, %v854
    %v857 = vlaneseq
    %v858 = vshrl.u32 %v857, 7
    %v859 = vsub.s32 1, %v858
    %v860 = vrot.slane %v842, %v859
    %v861 = vlaneseq
    %v862 = vshrl.u32 %v861, 7
    %v863 = vsub.s32 1, %v862
    %v864 = vrot.slane %v846, %v863
    %v865 = vmul.f32 %v785, %v860
    %v866 = vmul.f32 %v787, %v864
    %v868 = vlaneseq
    %v869 = vshrl.u32 %v868, 7
    %v870 = vsub.s32 2, %v869
    %v871 = vrot.slane %v856, %v870
    %v872 = vlaneseq
    %v873 = vshrl.u32 %v872, 7
    %v874 = vsub.s32 6, %v873
    %v875 = vrot.slane %v856, %v874
    %v878 = vlaneseq
    %v879 = vshrl.u32 %v878, 7
    %v880 = vsub.s32 2, %v879
    %v881 = vrot.slane %v871, %v880
    %v882 = vlaneseq
    %v883 = vshrl.u32 %v882, 7
    %v884 = vsub.s32 2, %v883
    %v885 = vrot.slane %v875, %v884
    %v886 = vadd.f32 %v865, %v881
    %v887 = vadd.f32 %v866, %v885
    %v888 = vmax.f32 %v886, 0.0
    %v889 = vmax.f32 %v887, 0.0
    %v890 = vld [vmem:[#allocation12] sm:$0xf]
    %v891 = vld [vmem:[#allocation12 + $0x4] sm:$0xf]
    %v892 = vld [vmem:[#allocation12 + $0x8] sm:$0xf]
    %v893 = vld [vmem:[#allocation12 + $0xc] sm:$0xf]
    %v894 = vld [vmem:[#allocation12 + $0x10] sm:$0xf]
    %v895 = vld [vmem:[#allocation12 + $0x14] sm:$0xf]
    %v896 = vld [vmem:[#allocation12 + $0x18] sm:$0xf]
    %v897 = vld [vmem:[#allocation12 + $0x1c] sm:$0xf]
    %v898 = vld [vmem:[#allocation12 + $0x20] sm:$0xf]
    %v899 = vld [vmem:[#allocation12 + $0x24] sm:$0xf]
    %v900 = vld [vmem:[#allocation12 + $0x28] sm:$0xf]
    %v901 = vld [vmem:[#allocation12 + $0x2c] sm:$0xf]
    %v902 = vld [vmem:[#allocation12 + $0x30] sm:$0xf]
    %v903 = vld [vmem:[#allocation12 + $0x34] sm:$0xf]
    %v904 = vld [vmem:[#allocation12 + $0x38] sm:$0xf]
    %v905 = vld [vmem:[#allocation12 + $0x3c] sm:$0xf]
    %v906 = vld [vmem:[#allocation12 + $0x40] sm:$0xf]
    %v907 = vld [vmem:[#allocation12 + $0x44] sm:$0xf]
    %v908 = vld [vmem:[#allocation12 + $0x48] sm:$0xf]
    %v909 = vld [vmem:[#allocation12 + $0x4c] sm:$0xf]
    %v910 = vld [vmem:[#allocation12 + $0x50] sm:$0xf]
    %v911 = vld [vmem:[#allocation12 + $0x54] sm:$0xf]
    %v912 = vld [vmem:[#allocation12 + $0x58] sm:$0xf]
    %v913 = vld [vmem:[#allocation12 + $0x5c] sm:$0xf]
    %v914 = vld [vmem:[#allocation12 + $0x60] sm:$0xf]
    %v915 = vld [vmem:[#allocation12 + $0x64] sm:$0xf]
    %v916 = vld [vmem:[#allocation12 + $0x68] sm:$0xf]
    %v917 = vld [vmem:[#allocation12 + $0x6c] sm:$0xf]
    %v918 = vld [vmem:[#allocation12 + $0x70] sm:$0xf]
    %v919 = vld [vmem:[#allocation12 + $0x74] sm:$0xf]
    %v920 = vld [vmem:[#allocation12 + $0x78] sm:$0xf]
    %v921 = vld [vmem:[#allocation12 + $0x7c] sm:$0xf]
    %s922 = scalar_lea.vmem [#allocation7], 8
    %v923 = vld [vmem:[%s922] sm:$0x77]
    %v924 = vpack.c.bf16 %v888, %v888
    %v925 = vpack.c.bf16 %v889, %v889
    %v926 = vlaneseq
    %v927 = vshrl.u32 %v926, 7
    %v928 = vsub.s32 0, %v927
    %v929 = vrot.slane %v923, %v928
    %v962 = vunpack.c.l.b16 %v890
    %v963 = vunpack.c.l.b16 %v891
    %v964 = vunpack.c.l.b16 %v892
    %v965 = vunpack.c.l.b16 %v893
    %v966 = vunpack.c.l.b16 %v894
    %v967 = vunpack.c.l.b16 %v895
    %v968 = vunpack.c.l.b16 %v896
    %v969 = vunpack.c.l.b16 %v897
    %v970 = vunpack.c.l.b16 %v898
    %v971 = vunpack.c.l.b16 %v899
    %v972 = vunpack.c.l.b16 %v900
    %v973 = vunpack.c.l.b16 %v901
    %v974 = vunpack.c.l.b16 %v902
    %v975 = vunpack.c.l.b16 %v903
    %v976 = vunpack.c.l.b16 %v904
    %v977 = vunpack.c.l.b16 %v905
    %v978 = vunpack.c.l.b16 %v906
    %v979 = vunpack.c.l.b16 %v907
    %v980 = vunpack.c.l.b16 %v908
    %v981 = vunpack.c.l.b16 %v909
    %v982 = vunpack.c.l.b16 %v910
    %v983 = vunpack.c.l.b16 %v911
    %v984 = vunpack.c.l.b16 %v912
    %v985 = vunpack.c.l.b16 %v913
    %v986 = vunpack.c.l.b16 %v914
    %v987 = vunpack.c.l.b16 %v915
    %v988 = vunpack.c.l.b16 %v916
    %v989 = vunpack.c.l.b16 %v917
    %v990 = vunpack.c.l.b16 %v918
    %v991 = vunpack.c.l.b16 %v919
    %v992 = vunpack.c.l.b16 %v920
    %v993 = vunpack.c.l.b16 %v921
    %v994 = vpack.c.b16 %v963, %v962
    %v995 = vpack.c.b16 %v965, %v964
    %v996 = vpack.c.b16 %v967, %v966
    %v997 = vpack.c.b16 %v969, %v968
    %v998 = vpack.c.b16 %v971, %v970
    %v999 = vpack.c.b16 %v973, %v972
    %v1000 = vpack.c.b16 %v975, %v974
    %v1001 = vpack.c.b16 %v977, %v976
    %v1002 = vpack.c.b16 %v979, %v978
    %v1003 = vpack.c.b16 %v981, %v980
    %v1004 = vpack.c.b16 %v983, %v982
    %v1005 = vpack.c.b16 %v985, %v984
    %v1006 = vpack.c.b16 %v987, %v986
    %v1007 = vpack.c.b16 %v989, %v988
    %v1008 = vpack.c.b16 %v991, %v990
    %v1009 = vpack.c.b16 %v993, %v992
    %1026 = vmatprep.subr.bf16.mxu0 0
    %1027 = vmatpush1.bf16.msra.mxu0 %v994
    %1028 = vmatprep.subr.bf16.mxu0 0
    %1029 = vmatpush1.bf16.msra.mxu0 %v995
    %1030 = vmatprep.subr.bf16.mxu0 0
    %1031 = vmatpush1.bf16.msra.mxu0 %v996
    %1032 = vmatprep.subr.bf16.mxu0 0
    %1033 = vmatpush1.bf16.msra.mxu0 %v997
    %1034 = vmatprep.subr.bf16.mxu0 0
    %1035 = vmatpush1.bf16.msra.mxu0 %v998
    %1036 = vmatprep.subr.bf16.mxu0 0
    %1037 = vmatpush1.bf16.msra.mxu0 %v999
    %1038 = vmatprep.subr.bf16.mxu0 0
    %1039 = vmatpush1.bf16.msra.mxu0 %v1000
    %1040 = vmatprep.subr.bf16.mxu0 0
    %1041 = vmatpush1.bf16.msra.mxu0 %v1001
    %1042 = vmatprep.subr.bf16.mxu0 0
    %1043 = vmatpush1.bf16.msra.mxu0 %v1002
    %1044 = vmatprep.subr.bf16.mxu0 0
    %1045 = vmatpush1.bf16.msra.mxu0 %v1003
    %1046 = vmatprep.subr.bf16.mxu0 0
    %1047 = vmatpush1.bf16.msra.mxu0 %v1004
    %1048 = vmatprep.subr.bf16.mxu0 0
    %1049 = vmatpush1.bf16.msra.mxu0 %v1005
    %1050 = vmatprep.subr.bf16.mxu0 0
    %1051 = vmatpush1.bf16.msra.mxu0 %v1006
    %1052 = vmatprep.subr.bf16.mxu0 0
    %1053 = vmatpush1.bf16.msra.mxu0 %v1007
    %1054 = vmatprep.subr.bf16.mxu0 0
    %1055 = vmatpush1.bf16.msra.mxu0 %v1008
    %1056 = vmatprep.subr.bf16.mxu0 0
    %1057 = vmatpush1.bf16.msra.mxu0 %v1009
    %1058 = vmatprep.mubr.bf16.mxu0 %v925
    %1059 = vmatmul.mubr.bf16.gmra.mrb[0].mxu0 %v924
    %v1060 = vpop.f32.mrb[0].mxu0
    %v1061 = vadd.f32 %v929, %v1060
    %v1062 = vpop.f32.mrb[0].mxu0
    %v1063 = vpop.f32.mrb[0].mxu0
    %v1064 = vpop.f32.mrb[0].mxu0
    %1065 = vdwg.mxu0
    %v1066 = vrot.slane %v1061, 4
    %v1067 = vadd.f32 %v1061, %v1066
    %v1068 = vrot.slane %v1067, 2
    %v1069 = vadd.f32 %v1067, %v1068
    %v1070 = vrot.slane %v1069, 1
    %v1071 = vadd.f32 %v1069, %v1070
    %v1072 = vmul.f32 %v1071, %v803
    %v1073 = vmul.f32 %v1061, %v1061
    %v1074 = vrot.slane %v1073, 4
    %v1075 = vadd.f32 %v1073, %v1074
    %v1076 = vrot.slane %v1075, 2
    %v1077 = vadd.f32 %v1075, %v1076
    %v1078 = vrot.slane %v1077, 1
    %v1079 = vadd.f32 %v1077, %v1078
    %v1080 = vmul.f32 %v1079, %v803
    %v1081 = vmul.f32 %v1072, %v1072
    %v1082 = vsub.f32 %v1080, %v1081
    %v1083 = vmax.f32 %v1082, 0.0
    %v1084 = vadd.f32 %v1083, 1e-05
    %v1085 = vrsqrt.pop %v1084
    %v1086 = vmul.f32 %v923, %v1085
    %v1088 = vlaneseq
    %v1089 = vshrl.u32 %v1088, 7
    %v1090 = vsub.s32 1, %v1089
    %v1091 = vrot.slane %v1086, %v1090
    %v1093 = vmul.f32 %v1072, %v1091
    %v1095 = vrot.slane %v1093, 6
    %v1097 = vsub.f32 %v923, %v1095
    %v1098 = vlaneseq
    %v1099 = vshrl.u32 %v1098, 7
    %v1100 = vsub.s32 1, %v1099
    %v1101 = vrot.slane %v1086, %v1100
    %v1102 = vmul.f32 %v1061, %v1101
    %v1103 = vlaneseq
    %v1104 = vshrl.u32 %v1103, 7
    %v1105 = vsub.s32 2, %v1104
    %v1106 = vrot.slane %v1097, %v1105
    %v1107 = vadd.f32 %v1102, %v1106
    %v1108 = vmax.f32 %v1107, 0.0
    %v1109 = vld [vmem:[#allocation13] sm:$0xf]
    %v1110 = vld [vmem:[#allocation13 + $0x4] sm:$0xf]
    %v1111 = vld [vmem:[#allocation13 + $0x8] sm:$0xf]
    %v1112 = vld [vmem:[#allocation13 + $0xc] sm:$0xf]
    %v1113 = vld [vmem:[#allocation13 + $0x10] sm:$0xf]
    %v1114 = vld [vmem:[#allocation13 + $0x14] sm:$0xf]
    %v1115 = vld [vmem:[#allocation13 + $0x18] sm:$0xf]
    %v1116 = vld [vmem:[#allocation13 + $0x1c] sm:$0xf]
    %v1117 = vld [vmem:[#allocation13 + $0x20] sm:$0xf]
    %v1118 = vld [vmem:[#allocation13 + $0x24] sm:$0xf]
    %v1119 = vld [vmem:[#allocation13 + $0x28] sm:$0xf]
    %v1120 = vld [vmem:[#allocation13 + $0x2c] sm:$0xf]
    %v1121 = vld [vmem:[#allocation13 + $0x30] sm:$0xf]
    %v1122 = vld [vmem:[#allocation13 + $0x34] sm:$0xf]
    %v1123 = vld [vmem:[#allocation13 + $0x38] sm:$0xf]
    %v1124 = vld [vmem:[#allocation13 + $0x3c] sm:$0xf]
    %s1125 = scalar_lea.vmem [#allocation7], 16
    %v1126 = vld [vmem:[%s1125] sm:$0x77]
    %v1127 = vpack.c.bf16 %v1108, %v1108
    %v1128 = vlaneseq
    %v1129 = vshrl.u32 %v1128, 7
    %v1130 = vsub.s32 0, %v1129
    %v1131 = vrot.slane %v1126, %v1130
    %v1148 = vunpack.c.l.b16 %v1109
    %v1149 = vunpack.c.l.b16 %v1110
    %v1150 = vunpack.c.l.b16 %v1111
    %v1151 = vunpack.c.l.b16 %v1112
    %v1152 = vunpack.c.l.b16 %v1113
    %v1153 = vunpack.c.l.b16 %v1114
    %v1154 = vunpack.c.l.b16 %v1115
    %v1155 = vunpack.c.l.b16 %v1116
    %v1156 = vunpack.c.l.b16 %v1117
    %v1157 = vunpack.c.l.b16 %v1118
    %v1158 = vunpack.c.l.b16 %v1119
    %v1159 = vunpack.c.l.b16 %v1120
    %v1160 = vunpack.c.l.b16 %v1121
    %v1161 = vunpack.c.l.b16 %v1122
    %v1162 = vunpack.c.l.b16 %v1123
    %v1163 = vunpack.c.l.b16 %v1124
    %v1164 = vpack.c.b16 %v1149, %v1148
    %v1165 = vpack.c.b16 %v1151, %v1150
    %v1166 = vpack.c.b16 %v1153, %v1152
    %v1167 = vpack.c.b16 %v1155, %v1154
    %v1168 = vpack.c.b16 %v1157, %v1156
    %v1169 = vpack.c.b16 %v1159, %v1158
    %v1170 = vpack.c.b16 %v1161, %v1160
    %v1171 = vpack.c.b16 %v1163, %v1162
    %1180 = vmatprep.subr.bf16.mxu0 0
    %1181 = vmatpush1.bf16.msra.mxu0 %v1164
    %1182 = vmatprep.subr.bf16.mxu0 0
    %1183 = vmatpush1.bf16.msra.mxu0 %v1165
    %1184 = vmatprep.subr.bf16.mxu0 0
    %1185 = vmatpush1.bf16.msra.mxu0 %v1166
    %1186 = vmatprep.subr.bf16.mxu0 0
    %1187 = vmatpush1.bf16.msra.mxu0 %v1167
    %1188 = vmatprep.subr.bf16.mxu0 0
    %1189 = vmatpush1.bf16.msra.mxu0 %v1168
    %1190 = vmatprep.subr.bf16.mxu0 0
    %1191 = vmatpush1.bf16.msra.mxu0 %v1169
    %1192 = vmatprep.subr.bf16.mxu0 0
    %1193 = vmatpush1.bf16.msra.mxu0 %v1170
    %1194 = vmatprep.subr.bf16.mxu0 0
    %1195 = vmatpush1.bf16.msra.mxu0 %v1171
    %1196 = vmatprep.subr.bf16.mxu0 0
    %1197 = vmatpush1.bf16.msra.mxu0 0
    %1198 = vmatprep.subr.bf16.mxu0 0
    %1199 = vmatpush1.bf16.msra.mxu0 0
    %1200 = vmatprep.subr.bf16.mxu0 0
    %1201 = vmatpush1.bf16.msra.mxu0 0
    %1202 = vmatprep.subr.bf16.mxu0 0
    %1203 = vmatpush1.bf16.msra.mxu0 0
    %1204 = vmatprep.subr.bf16.mxu0 0
    %1205 = vmatpush1.bf16.msra.mxu0 0
    %1206 = vmatprep.subr.bf16.mxu0 0
    %1207 = vmatpush1.bf16.msra.mxu0 0
    %1208 = vmatprep.subr.bf16.mxu0 0
    %1209 = vmatpush1.bf16.msra.mxu0 0
    %1210 = vmatprep.subr.bf16.mxu0 0
    %1211 = vmatpush1.bf16.msra.mxu0 0
    %1212 = vmatprep.mubr.bf16.mxu0 0
    %1213 = vmatmul.mubr.bf16.gmra.mrb[0].mxu0 %v1127
    %v1214 = vpop.f32.mrb[0].mxu0
    %v1215 = vadd.f32 %v1131, %v1214
    %v1216 = vpop.f32.mrb[0].mxu0
    %v1217 = vpop.f32.mrb[0].mxu0
    %v1218 = vpop.f32.mrb[0].mxu0
    %1219 = vdwg.mxu0
    %v1220 = vrot.slane %v1215, 4
    %v1221 = vadd.f32 %v1215, %v1220
    %v1222 = vrot.slane %v1221, 2
    %v1223 = vadd.f32 %v1221, %v1222
    %v1224 = vrot.slane %v1223, 1
    %v1225 = vadd.f32 %v1223, %v1224
    %v1226 = vmul.f32 %v1225, %v803
    %v1227 = vmul.f32 %v1215, %v1215
    %v1228 = vrot.slane %v1227, 4
    %v1229 = vadd.f32 %v1227, %v1228
    %v1230 = vrot.slane %v1229, 2
    %v1231 = vadd.f32 %v1229, %v1230
    %v1232 = vrot.slane %v1231, 1
    %v1233 = vadd.f32 %v1231, %v1232
    %v1234 = vmul.f32 %v1233, %v803
    %v1235 = vmul.f32 %v1226, %v1226
    %v1236 = vsub.f32 %v1234, %v1235
    %v1237 = vmax.f32 %v1236, 0.0
    %v1238 = vadd.f32 %v1237, 1e-05
    %v1239 = vrsqrt.pop %v1238
    %v1240 = vmul.f32 %v1126, %v1239
    %v1242 = vlaneseq
    %v1243 = vshrl.u32 %v1242, 7
    %v1244 = vsub.s32 1, %v1243
    %v1245 = vrot.slane %v1240, %v1244
    %v1247 = vmul.f32 %v1226, %v1245
    %v1249 = vrot.slane %v1247, 6
    %v1251 = vsub.f32 %v1126, %v1249
    %v1252 = vlaneseq
    %v1253 = vshrl.u32 %v1252, 7
    %v1254 = vsub.s32 1, %v1253
    %v1255 = vrot.slane %v1240, %v1254
    %v1256 = vmul.f32 %v1215, %v1255
    %v1257 = vlaneseq
    %v1258 = vshrl.u32 %v1257, 7
    %v1259 = vsub.s32 2, %v1258
    %v1260 = vrot.slane %v1251, %v1259
    %v1261 = vadd.f32 %v1256, %v1260
    %v1262 = vmax.f32 %v1261, 0.0
    %s1263 = scalar_lea.vmem [#allocation13], 64
    %v1264 = vld [vmem:[%s1263] sm:$0xf]
    %v1265 = vld [vmem:[%s1263 + $0x4] sm:$0xf]
    %v1266 = vld [vmem:[%s1263 + $0x8] sm:$0xf]
    %v1267 = vld [vmem:[%s1263 + $0xc] sm:$0xf]
    %v1268 = vld [vmem:[%s1263 + $0x10] sm:$0xf]
    %v1269 = vld [vmem:[%s1263 + $0x14] sm:$0xf]
    %v1270 = vld [vmem:[%s1263 + $0x18] sm:$0xf]
    %v1271 = vld [vmem:[%s1263 + $0x1c] sm:$0xf]
    %v1272 = vld [vmem:[%s1263 + $0x20] sm:$0xf]
    %v1273 = vld [vmem:[%s1263 + $0x24] sm:$0xf]
    %v1274 = vld [vmem:[%s1263 + $0x28] sm:$0xf]
    %v1275 = vld [vmem:[%s1263 + $0x2c] sm:$0xf]
    %v1276 = vld [vmem:[%s1263 + $0x30] sm:$0xf]
    %v1277 = vld [vmem:[%s1263 + $0x34] sm:$0xf]
    %v1278 = vld [vmem:[%s1263 + $0x38] sm:$0xf]
    %v1279 = vld [vmem:[%s1263 + $0x3c] sm:$0xf]
    %s1280 = scalar_lea.vmem [#allocation7], 24
    %v1281 = vld [vmem:[%s1280] sm:$0x77]
    %v1282 = vpack.c.bf16 %v1262, %v1262
    %v1283 = vlaneseq
    %v1284 = vshrl.u32 %v1283, 7
    %v1285 = vsub.s32 0, %v1284
    %v1286 = vrot.slane %v1281, %v1285
    %v1303 = vunpack.c.l.b16 %v1264
    %v1304 = vunpack.c.l.b16 %v1265
    %v1305 = vunpack.c.l.b16 %v1266
    %v1306 = vunpack.c.l.b16 %v1267
    %v1307 = vunpack.c.l.b16 %v1268
    %v1308 = vunpack.c.l.b16 %v1269
    %v1309 = vunpack.c.l.b16 %v1270
    %v1310 = vunpack.c.l.b16 %v1271
    %v1311 = vunpack.c.l.b16 %v1272
    %v1312 = vunpack.c.l.b16 %v1273
    %v1313 = vunpack.c.l.b16 %v1274
    %v1314 = vunpack.c.l.b16 %v1275
    %v1315 = vunpack.c.l.b16 %v1276
    %v1316 = vunpack.c.l.b16 %v1277
    %v1317 = vunpack.c.l.b16 %v1278
    %v1318 = vunpack.c.l.b16 %v1279
    %v1319 = vpack.c.b16 %v1304, %v1303
    %v1320 = vpack.c.b16 %v1306, %v1305
    %v1321 = vpack.c.b16 %v1308, %v1307
    %v1322 = vpack.c.b16 %v1310, %v1309
    %v1323 = vpack.c.b16 %v1312, %v1311
    %v1324 = vpack.c.b16 %v1314, %v1313
    %v1325 = vpack.c.b16 %v1316, %v1315
    %v1326 = vpack.c.b16 %v1318, %v1317
    %1335 = vmatprep.subr.bf16.mxu0 0
    %1336 = vmatpush1.bf16.msra.mxu0 %v1319
    %1337 = vmatprep.subr.bf16.mxu0 0
    %1338 = vmatpush1.bf16.msra.mxu0 %v1320
    %1339 = vmatprep.subr.bf16.mxu0 0
    %1340 = vmatpush1.bf16.msra.mxu0 %v1321
    %1341 = vmatprep.subr.bf16.mxu0 0
    %1342 = vmatpush1.bf16.msra.mxu0 %v1322
    %1343 = vmatprep.subr.bf16.mxu0 0
    %1344 = vmatpush1.bf16.msra.mxu0 %v1323
    %1345 = vmatprep.subr.bf16.mxu0 0
    %1346 = vmatpush1.bf16.msra.mxu0 %v1324
    %1347 = vmatprep.subr.bf16.mxu0 0
    %1348 = vmatpush1.bf16.msra.mxu0 %v1325
    %1349 = vmatprep.subr.bf16.mxu0 0
    %1350 = vmatpush1.bf16.msra.mxu0 %v1326
    %1351 = vmatprep.subr.bf16.mxu0 0
    %1352 = vmatpush1.bf16.msra.mxu0 0
    %1353 = vmatprep.subr.bf16.mxu0 0
    %1354 = vmatpush1.bf16.msra.mxu0 0
    %1355 = vmatprep.subr.bf16.mxu0 0
    %1356 = vmatpush1.bf16.msra.mxu0 0
    %1357 = vmatprep.subr.bf16.mxu0 0
    %1358 = vmatpush1.bf16.msra.mxu0 0
    %1359 = vmatprep.subr.bf16.mxu0 0
    %1360 = vmatpush1.bf16.msra.mxu0 0
    %1361 = vmatprep.subr.bf16.mxu0 0
    %1362 = vmatpush1.bf16.msra.mxu0 0
    %1363 = vmatprep.subr.bf16.mxu0 0
    %1364 = vmatpush1.bf16.msra.mxu0 0
    %1365 = vmatprep.subr.bf16.mxu0 0
    %1366 = vmatpush1.bf16.msra.mxu0 0
    %1367 = vmatprep.mubr.bf16.mxu0 0
    %1368 = vmatmul.mubr.bf16.gmra.mrb[0].mxu0 %v1282
    %v1369 = vpop.f32.mrb[0].mxu0
    %v1370 = vadd.f32 %v1286, %v1369
    %v1371 = vpop.f32.mrb[0].mxu0
    %v1372 = vpop.f32.mrb[0].mxu0
    %v1373 = vpop.f32.mrb[0].mxu0
    %1374 = vdwg.mxu0
    %v1375 = vrot.slane %v1370, 4
    %v1376 = vadd.f32 %v1370, %v1375
    %v1377 = vrot.slane %v1376, 2
    %v1378 = vadd.f32 %v1376, %v1377
    %v1379 = vrot.slane %v1378, 1
    %v1380 = vadd.f32 %v1378, %v1379
    %v1381 = vmul.f32 %v1380, %v803
    %v1382 = vmul.f32 %v1370, %v1370
    %v1383 = vrot.slane %v1382, 4
    %v1384 = vadd.f32 %v1382, %v1383
    %v1385 = vrot.slane %v1384, 2
    %v1386 = vadd.f32 %v1384, %v1385
    %v1387 = vrot.slane %v1386, 1
    %v1388 = vadd.f32 %v1386, %v1387
    %v1389 = vmul.f32 %v1388, %v803
    %v1390 = vmul.f32 %v1381, %v1381
    %v1391 = vsub.f32 %v1389, %v1390
    %v1392 = vmax.f32 %v1391, 0.0
    %v1393 = vadd.f32 %v1392, 1e-05
    %v1394 = vrsqrt.pop %v1393
    %v1395 = vmul.f32 %v1281, %v1394
    %v1397 = vlaneseq
    %v1398 = vshrl.u32 %v1397, 7
    %v1399 = vsub.s32 1, %v1398
    %v1400 = vrot.slane %v1395, %v1399
    %v1402 = vmul.f32 %v1381, %v1400
    %v1404 = vrot.slane %v1402, 6
    %v1406 = vsub.f32 %v1281, %v1404
    %v1407 = vlaneseq
    %v1408 = vshrl.u32 %v1407, 7
    %v1409 = vsub.s32 1, %v1408
    %v1410 = vrot.slane %v1395, %v1409
    %v1411 = vmul.f32 %v1370, %v1410
    %v1412 = vlaneseq
    %v1413 = vshrl.u32 %v1412, 7
    %v1414 = vsub.s32 2, %v1413
    %v1415 = vrot.slane %v1406, %v1414
    %v1416 = vadd.f32 %v1411, %v1415
    %v1417 = vmax.f32 %v1416, 0.0
    %s1418 = scalar_lea.vmem [#allocation13], 128
    %v1419 = vld [vmem:[%s1418] sm:$0xf]
    %v1420 = vld [vmem:[%s1418 + $0x4] sm:$0xf]
    %v1421 = vld [vmem:[%s1418 + $0x8] sm:$0xf]
    %v1422 = vld [vmem:[%s1418 + $0xc] sm:$0xf]
    %v1423 = vld [vmem:[%s1418 + $0x10] sm:$0xf]
    %v1424 = vld [vmem:[%s1418 + $0x14] sm:$0xf]
    %v1425 = vld [vmem:[%s1418 + $0x18] sm:$0xf]
    %v1426 = vld [vmem:[%s1418 + $0x1c] sm:$0xf]
    %v1427 = vld [vmem:[%s1418 + $0x20] sm:$0xf]
    %v1428 = vld [vmem:[%s1418 + $0x24] sm:$0xf]
    %v1429 = vld [vmem:[%s1418 + $0x28] sm:$0xf]
    %v1430 = vld [vmem:[%s1418 + $0x2c] sm:$0xf]
    %v1431 = vld [vmem:[%s1418 + $0x30] sm:$0xf]
    %v1432 = vld [vmem:[%s1418 + $0x34] sm:$0xf]
    %v1433 = vld [vmem:[%s1418 + $0x38] sm:$0xf]
    %v1434 = vld [vmem:[%s1418 + $0x3c] sm:$0xf]
    %s1435 = scalar_lea.vmem [#allocation7], 32
    %v1436 = vld [vmem:[%s1435] sm:$0x77]
    %v1437 = vpack.c.bf16 %v1417, %v1417
    %v1438 = vlaneseq
    %v1439 = vshrl.u32 %v1438, 7
    %v1440 = vsub.s32 0, %v1439
    %v1441 = vrot.slane %v1436, %v1440
    %v1458 = vunpack.c.l.b16 %v1419
    %v1459 = vunpack.c.l.b16 %v1420
    %v1460 = vunpack.c.l.b16 %v1421
    %v1461 = vunpack.c.l.b16 %v1422
    %v1462 = vunpack.c.l.b16 %v1423
    %v1463 = vunpack.c.l.b16 %v1424
    %v1464 = vunpack.c.l.b16 %v1425
    %v1465 = vunpack.c.l.b16 %v1426
    %v1466 = vunpack.c.l.b16 %v1427
    %v1467 = vunpack.c.l.b16 %v1428
    %v1468 = vunpack.c.l.b16 %v1429
    %v1469 = vunpack.c.l.b16 %v1430
    %v1470 = vunpack.c.l.b16 %v1431
    %v1471 = vunpack.c.l.b16 %v1432
    %v1472 = vunpack.c.l.b16 %v1433
    %v1473 = vunpack.c.l.b16 %v1434
    %v1474 = vpack.c.b16 %v1459, %v1458
    %v1475 = vpack.c.b16 %v1461, %v1460
    %v1476 = vpack.c.b16 %v1463, %v1462
    %v1477 = vpack.c.b16 %v1465, %v1464
    %v1478 = vpack.c.b16 %v1467, %v1466
    %v1479 = vpack.c.b16 %v1469, %v1468
    %v1480 = vpack.c.b16 %v1471, %v1470
    %v1481 = vpack.c.b16 %v1473, %v1472
    %1490 = vmatprep.subr.bf16.mxu0 0
    %1491 = vmatpush1.bf16.msra.mxu0 %v1474
    %1492 = vmatprep.subr.bf16.mxu0 0
    %1493 = vmatpush1.bf16.msra.mxu0 %v1475
    %1494 = vmatprep.subr.bf16.mxu0 0
    %1495 = vmatpush1.bf16.msra.mxu0 %v1476
    %1496 = vmatprep.subr.bf16.mxu0 0
    %1497 = vmatpush1.bf16.msra.mxu0 %v1477
    %1498 = vmatprep.subr.bf16.mxu0 0
    %1499 = vmatpush1.bf16.msra.mxu0 %v1478
    %1500 = vmatprep.subr.bf16.mxu0 0
    %1501 = vmatpush1.bf16.msra.mxu0 %v1479
    %1502 = vmatprep.subr.bf16.mxu0 0
    %1503 = vmatpush1.bf16.msra.mxu0 %v1480
    %1504 = vmatprep.subr.bf16.mxu0 0
    %1505 = vmatpush1.bf16.msra.mxu0 %v1481
    %1506 = vmatprep.subr.bf16.mxu0 0
    %1507 = vmatpush1.bf16.msra.mxu0 0
    %1508 = vmatprep.subr.bf16.mxu0 0
    %1509 = vmatpush1.bf16.msra.mxu0 0
    %1510 = vmatprep.subr.bf16.mxu0 0
    %1511 = vmatpush1.bf16.msra.mxu0 0
    %1512 = vmatprep.subr.bf16.mxu0 0
    %1513 = vmatpush1.bf16.msra.mxu0 0
    %1514 = vmatprep.subr.bf16.mxu0 0
    %1515 = vmatpush1.bf16.msra.mxu0 0
    %1516 = vmatprep.subr.bf16.mxu0 0
    %1517 = vmatpush1.bf16.msra.mxu0 0
    %1518 = vmatprep.subr.bf16.mxu0 0
    %1519 = vmatpush1.bf16.msra.mxu0 0
    %1520 = vmatprep.subr.bf16.mxu0 0
    %1521 = vmatpush1.bf16.msra.mxu0 0
    %1522 = vmatprep.mubr.bf16.mxu0 0
    %1523 = vmatmul.mubr.bf16.gmra.mrb[0].mxu0 %v1437
    %v1524 = vpop.f32.mrb[0].mxu0
    %v1525 = vadd.f32 %v1441, %v1524
    %v1526 = vpop.f32.mrb[0].mxu0
    %v1527 = vpop.f32.mrb[0].mxu0
    %v1528 = vpop.f32.mrb[0].mxu0
    %1529 = vdwg.mxu0
    %v1530 = vrot.slane %v1525, 4
    %v1531 = vadd.f32 %v1525, %v1530
    %v1532 = vrot.slane %v1531, 2
    %v1533 = vadd.f32 %v1531, %v1532
    %v1534 = vrot.slane %v1533, 1
    %v1535 = vadd.f32 %v1533, %v1534
    %v1536 = vmul.f32 %v1535, %v803
    %v1537 = vmul.f32 %v1525, %v1525
    %v1538 = vrot.slane %v1537, 4
    %v1539 = vadd.f32 %v1537, %v1538
    %v1540 = vrot.slane %v1539, 2
    %v1541 = vadd.f32 %v1539, %v1540
    %v1542 = vrot.slane %v1541, 1
    %v1543 = vadd.f32 %v1541, %v1542
    %v1544 = vmul.f32 %v1543, %v803
    %v1545 = vmul.f32 %v1536, %v1536
    %v1546 = vsub.f32 %v1544, %v1545
    %v1547 = vmax.f32 %v1546, 0.0
    %v1548 = vadd.f32 %v1547, 1e-05
    %v1549 = vrsqrt.pop %v1548
    %v1550 = vmul.f32 %v1436, %v1549
    %v1552 = vlaneseq
    %v1553 = vshrl.u32 %v1552, 7
    %v1554 = vsub.s32 1, %v1553
    %v1555 = vrot.slane %v1550, %v1554
    %v1557 = vmul.f32 %v1536, %v1555
    %v1559 = vrot.slane %v1557, 6
    %v1561 = vsub.f32 %v1436, %v1559
    %v1562 = vlaneseq
    %v1563 = vshrl.u32 %v1562, 7
    %v1564 = vsub.s32 1, %v1563
    %v1565 = vrot.slane %v1550, %v1564
    %v1566 = vmul.f32 %v1525, %v1565
    %v1567 = vlaneseq
    %v1568 = vshrl.u32 %v1567, 7
    %v1569 = vsub.s32 2, %v1568
    %v1570 = vrot.slane %v1561, %v1569
    %v1571 = vadd.f32 %v1566, %v1570
    %v1572 = vmax.f32 %v1571, 0.0
    %1573 = vst [vmem:[#allocation17] sm:$0xff] %v1572
    %s1574 = scalar_lea.vmem [#allocation13], 192
    %v1575 = vld [vmem:[%s1574] sm:$0xf]
    %v1576 = vld [vmem:[%s1574 + $0x4] sm:$0xf]
    %v1577 = vld [vmem:[%s1574 + $0x8] sm:$0xf]
    %v1578 = vld [vmem:[%s1574 + $0xc] sm:$0xf]
    %v1579 = vld [vmem:[%s1574 + $0x10] sm:$0xf]
    %v1580 = vld [vmem:[%s1574 + $0x14] sm:$0xf]
    %v1581 = vld [vmem:[%s1574 + $0x18] sm:$0xf]
    %v1582 = vld [vmem:[%s1574 + $0x1c] sm:$0xf]
    %v1583 = vld [vmem:[%s1574 + $0x20] sm:$0xf]
    %v1584 = vld [vmem:[%s1574 + $0x24] sm:$0xf]
    %v1585 = vld [vmem:[%s1574 + $0x28] sm:$0xf]
    %v1586 = vld [vmem:[%s1574 + $0x2c] sm:$0xf]
    %v1587 = vld [vmem:[%s1574 + $0x30] sm:$0xf]
    %v1588 = vld [vmem:[%s1574 + $0x34] sm:$0xf]
    %v1589 = vld [vmem:[%s1574 + $0x38] sm:$0xf]
    %v1590 = vld [vmem:[%s1574 + $0x3c] sm:$0xf]
    %s1591 = scalar_lea.vmem [#allocation7], 40
    %v1592 = vld [vmem:[%s1591] sm:$0x77]
    %v1593 = vpack.c.bf16 %v1572, %v1572
    %v1594 = vlaneseq
    %v1595 = vshrl.u32 %v1594, 7
    %v1596 = vsub.s32 0, %v1595
    %v1597 = vrot.slane %v1592, %v1596
    %v1614 = vunpack.c.l.b16 %v1575
    %v1615 = vunpack.c.l.b16 %v1576
    %v1616 = vunpack.c.l.b16 %v1577
    %v1617 = vunpack.c.l.b16 %v1578
    %v1618 = vunpack.c.l.b16 %v1579
    %v1619 = vunpack.c.l.b16 %v1580
    %v1620 = vunpack.c.l.b16 %v1581
    %v1621 = vunpack.c.l.b16 %v1582
    %v1622 = vunpack.c.l.b16 %v1583
    %v1623 = vunpack.c.l.b16 %v1584
    %v1624 = vunpack.c.l.b16 %v1585
    %v1625 = vunpack.c.l.b16 %v1586
    %v1626 = vunpack.c.l.b16 %v1587
    %v1627 = vunpack.c.l.b16 %v1588
    %v1628 = vunpack.c.l.b16 %v1589
    %v1629 = vunpack.c.l.b16 %v1590
    %v1630 = vpack.c.b16 %v1615, %v1614
    %v1631 = vpack.c.b16 %v1617, %v1616
    %v1632 = vpack.c.b16 %v1619, %v1618
    %v1633 = vpack.c.b16 %v1621, %v1620
    %v1634 = vpack.c.b16 %v1623, %v1622
    %v1635 = vpack.c.b16 %v1625, %v1624
    %v1636 = vpack.c.b16 %v1627, %v1626
    %v1637 = vpack.c.b16 %v1629, %v1628
    %1646 = vmatprep.subr.bf16.mxu0 0
    %1647 = vmatpush1.bf16.msra.mxu0 %v1630
    %1648 = vmatprep.subr.bf16.mxu0 0
    %1649 = vmatpush1.bf16.msra.mxu0 %v1631
    %1650 = vmatprep.subr.bf16.mxu0 0
    %1651 = vmatpush1.bf16.msra.mxu0 %v1632
    %1652 = vmatprep.subr.bf16.mxu0 0
    %1653 = vmatpush1.bf16.msra.mxu0 %v1633
    %1654 = vmatprep.subr.bf16.mxu0 0
    %1655 = vmatpush1.bf16.msra.mxu0 %v1634
    %1656 = vmatprep.subr.bf16.mxu0 0
    %1657 = vmatpush1.bf16.msra.mxu0 %v1635
    %1658 = vmatprep.subr.bf16.mxu0 0
    %1659 = vmatpush1.bf16.msra.mxu0 %v1636
    %1660 = vmatprep.subr.bf16.mxu0 0
    %1661 = vmatpush1.bf16.msra.mxu0 %v1637
    %1662 = vmatprep.subr.bf16.mxu0 0
    %1663 = vmatpush1.bf16.msra.mxu0 0
    %1664 = vmatprep.subr.bf16.mxu0 0
    %1665 = vmatpush1.bf16.msra.mxu0 0
    %1666 = vmatprep.subr.bf16.mxu0 0
    %1667 = vmatpush1.bf16.msra.mxu0 0
    %1668 = vmatprep.subr.bf16.mxu0 0
    %1669 = vmatpush1.bf16.msra.mxu0 0
    %1670 = vmatprep.subr.bf16.mxu0 0
    %1671 = vmatpush1.bf16.msra.mxu0 0
    %1672 = vmatprep.subr.bf16.mxu0 0
    %1673 = vmatpush1.bf16.msra.mxu0 0
    %1674 = vmatprep.subr.bf16.mxu0 0
    %1675 = vmatpush1.bf16.msra.mxu0 0
    %1676 = vmatprep.subr.bf16.mxu0 0
    %1677 = vmatpush1.bf16.msra.mxu0 0
    %1678 = vmatprep.mubr.bf16.mxu0 0
    %1679 = vmatmul.mubr.bf16.gmra.mrb[0].mxu0 %v1593
    %v1680 = vpop.f32.mrb[0].mxu0
    %v1681 = vadd.f32 %v1597, %v1680
    %v1682 = vpop.f32.mrb[0].mxu0
    %v1683 = vpop.f32.mrb[0].mxu0
    %v1684 = vpop.f32.mrb[0].mxu0
    %1685 = vdwg.mxu0
    %v1686 = vrot.slane %v1681, 4
    %v1687 = vadd.f32 %v1681, %v1686
    %v1688 = vrot.slane %v1687, 2
    %v1689 = vadd.f32 %v1687, %v1688
    %v1690 = vrot.slane %v1689, 1
    %v1691 = vadd.f32 %v1689, %v1690
    %v1692 = vmul.f32 %v1691, %v803
    %v1693 = vmul.f32 %v1681, %v1681
    %v1694 = vrot.slane %v1693, 4
    %v1695 = vadd.f32 %v1693, %v1694
    %v1696 = vrot.slane %v1695, 2
    %v1697 = vadd.f32 %v1695, %v1696
    %v1698 = vrot.slane %v1697, 1
    %v1699 = vadd.f32 %v1697, %v1698
    %v1700 = vmul.f32 %v1699, %v803
    %v1701 = vmul.f32 %v1692, %v1692
    %v1702 = vsub.f32 %v1700, %v1701
    %v1703 = vmax.f32 %v1702, 0.0
    %v1704 = vadd.f32 %v1703, 1e-05
    %v1705 = vrsqrt.pop %v1704
    %v1706 = vmul.f32 %v1592, %v1705
    %v1708 = vlaneseq
    %v1709 = vshrl.u32 %v1708, 7
    %v1710 = vsub.s32 1, %v1709
    %v1711 = vrot.slane %v1706, %v1710
    %v1713 = vmul.f32 %v1692, %v1711
    %v1715 = vrot.slane %v1713, 6
    %v1717 = vsub.f32 %v1592, %v1715
    %v1718 = vlaneseq
    %v1719 = vshrl.u32 %v1718, 7
    %v1720 = vsub.s32 1, %v1719
    %v1721 = vrot.slane %v1706, %v1720
    %v1722 = vmul.f32 %v1681, %v1721
    %v1723 = vlaneseq
    %v1724 = vshrl.u32 %v1723, 7
    %v1725 = vsub.s32 2, %v1724
    %v1726 = vrot.slane %v1717, %v1725
    %v1727 = vadd.f32 %v1722, %v1726
    %v1728 = vmax.f32 %v1727, 0.0
    %s1729 = scalar_lea.vmem [#allocation13], 256
    %v1730 = vld [vmem:[%s1729] sm:$0xf]
    %v1731 = vld [vmem:[%s1729 + $0x4] sm:$0xf]
    %v1732 = vld [vmem:[%s1729 + $0x8] sm:$0xf]
    %v1733 = vld [vmem:[%s1729 + $0xc] sm:$0xf]
    %v1734 = vld [vmem:[%s1729 + $0x10] sm:$0xf]
    %v1735 = vld [vmem:[%s1729 + $0x14] sm:$0xf]
    %v1736 = vld [vmem:[%s1729 + $0x18] sm:$0xf]
    %v1737 = vld [vmem:[%s1729 + $0x1c] sm:$0xf]
    %v1738 = vld [vmem:[%s1729 + $0x20] sm:$0xf]
    %v1739 = vld [vmem:[%s1729 + $0x24] sm:$0xf]
    %v1740 = vld [vmem:[%s1729 + $0x28] sm:$0xf]
    %v1741 = vld [vmem:[%s1729 + $0x2c] sm:$0xf]
    %v1742 = vld [vmem:[%s1729 + $0x30] sm:$0xf]
    %v1743 = vld [vmem:[%s1729 + $0x34] sm:$0xf]
    %v1744 = vld [vmem:[%s1729 + $0x38] sm:$0xf]
    %v1745 = vld [vmem:[%s1729 + $0x3c] sm:$0xf]
    %s1746 = scalar_lea.vmem [#allocation7], 48
    %v1747 = vld [vmem:[%s1746] sm:$0x77]
    %v1748 = vpack.c.bf16 %v1728, %v1728
    %v1749 = vlaneseq
    %v1750 = vshrl.u32 %v1749, 7
    %v1751 = vsub.s32 0, %v1750
    %v1752 = vrot.slane %v1747, %v1751
    %v1769 = vunpack.c.l.b16 %v1730
    %v1770 = vunpack.c.l.b16 %v1731
    %v1771 = vunpack.c.l.b16 %v1732
    %v1772 = vunpack.c.l.b16 %v1733
    %v1773 = vunpack.c.l.b16 %v1734
    %v1774 = vunpack.c.l.b16 %v1735
    %v1775 = vunpack.c.l.b16 %v1736
    %v1776 = vunpack.c.l.b16 %v1737
    %v1777 = vunpack.c.l.b16 %v1738
    %v1778 = vunpack.c.l.b16 %v1739
    %v1779 = vunpack.c.l.b16 %v1740
    %v1780 = vunpack.c.l.b16 %v1741
    %v1781 = vunpack.c.l.b16 %v1742
    %v1782 = vunpack.c.l.b16 %v1743
    %v1783 = vunpack.c.l.b16 %v1744
    %v1784 = vunpack.c.l.b16 %v1745
    %v1785 = vpack.c.b16 %v1770, %v1769
    %v1786 = vpack.c.b16 %v1772, %v1771
    %v1787 = vpack.c.b16 %v1774, %v1773
    %v1788 = vpack.c.b16 %v1776, %v1775
    %v1789 = vpack.c.b16 %v1778, %v1777
    %v1790 = vpack.c.b16 %v1780, %v1779
    %v1791 = vpack.c.b16 %v1782, %v1781
    %v1792 = vpack.c.b16 %v1784, %v1783
    %1801 = vmatprep.subr.bf16.mxu0 0
    %1802 = vmatpush1.bf16.msra.mxu0 %v1785
    %1803 = vmatprep.subr.bf16.mxu0 0
    %1804 = vmatpush1.bf16.msra.mxu0 %v1786
    %1805 = vmatprep.subr.bf16.mxu0 0
    %1806 = vmatpush1.bf16.msra.mxu0 %v1787
    %1807 = vmatprep.subr.bf16.mxu0 0
    %1808 = vmatpush1.bf16.msra.mxu0 %v1788
    %1809 = vmatprep.subr.bf16.mxu0 0
    %1810 = vmatpush1.bf16.msra.mxu0 %v1789
    %1811 = vmatprep.subr.bf16.mxu0 0
    %1812 = vmatpush1.bf16.msra.mxu0 %v1790
    %1813 = vmatprep.subr.bf16.mxu0 0
    %1814 = vmatpush1.bf16.msra.mxu0 %v1791
    %1815 = vmatprep.subr.bf16.mxu0 0
    %1816 = vmatpush1.bf16.msra.mxu0 %v1792
    %1817 = vmatprep.subr.bf16.mxu0 0
    %1818 = vmatpush1.bf16.msra.mxu0 0
    %1819 = vmatprep.subr.bf16.mxu0 0
    %1820 = vmatpush1.bf16.msra.mxu0 0
    %1821 = vmatprep.subr.bf16.mxu0 0
    %1822 = vmatpush1.bf16.msra.mxu0 0
    %1823 = vmatprep.subr.bf16.mxu0 0
    %1824 = vmatpush1.bf16.msra.mxu0 0
    %1825 = vmatprep.subr.bf16.mxu0 0
    %1826 = vmatpush1.bf16.msra.mxu0 0
    %1827 = vmatprep.subr.bf16.mxu0 0
    %1828 = vmatpush1.bf16.msra.mxu0 0
    %1829 = vmatprep.subr.bf16.mxu0 0
    %1830 = vmatpush1.bf16.msra.mxu0 0
    %1831 = vmatprep.subr.bf16.mxu0 0
    %1832 = vmatpush1.bf16.msra.mxu0 0
    %1833 = vmatprep.mubr.bf16.mxu0 0
    %1834 = vmatmul.mubr.bf16.gmra.mrb[0].mxu0 %v1748
    %v1835 = vpop.f32.mrb[0].mxu0
    %v1836 = vadd.f32 %v1752, %v1835
    %v1837 = vpop.f32.mrb[0].mxu0
    %v1838 = vpop.f32.mrb[0].mxu0
    %v1839 = vpop.f32.mrb[0].mxu0
    %1840 = vdwg.mxu0
    %v1841 = vrot.slane %v1836, 4
    %v1842 = vadd.f32 %v1836, %v1841
    %v1843 = vrot.slane %v1842, 2
    %v1844 = vadd.f32 %v1842, %v1843
    %v1845 = vrot.slane %v1844, 1
    %v1846 = vadd.f32 %v1844, %v1845
    %v1847 = vmul.f32 %v1846, %v803
    %v1848 = vmul.f32 %v1836, %v1836
    %v1849 = vrot.slane %v1848, 4
    %v1850 = vadd.f32 %v1848, %v1849
    %v1851 = vrot.slane %v1850, 2
    %v1852 = vadd.f32 %v1850, %v1851
    %v1853 = vrot.slane %v1852, 1
    %v1854 = vadd.f32 %v1852, %v1853
    %v1855 = vmul.f32 %v1854, %v803
    %v1856 = vmul.f32 %v1847, %v1847
    %v1857 = vsub.f32 %v1855, %v1856
    %v1858 = vmax.f32 %v1857, 0.0
    %v1859 = vadd.f32 %v1858, 1e-05
    %v1860 = vrsqrt.pop %v1859
    %v1861 = vmul.f32 %v1747, %v1860
    %v1863 = vlaneseq
    %v1864 = vshrl.u32 %v1863, 7
    %v1865 = vsub.s32 1, %v1864
    %v1866 = vrot.slane %v1861, %v1865
    %v1868 = vmul.f32 %v1847, %v1866
    %v1870 = vrot.slane %v1868, 6
    %v1872 = vsub.f32 %v1747, %v1870
    %v1873 = vlaneseq
    %v1874 = vshrl.u32 %v1873, 7
    %v1875 = vsub.s32 1, %v1874
    %v1876 = vrot.slane %v1861, %v1875
    %v1877 = vmul.f32 %v1836, %v1876
    %v1878 = vlaneseq
    %v1879 = vshrl.u32 %v1878, 7
    %v1880 = vsub.s32 2, %v1879
    %v1881 = vrot.slane %v1872, %v1880
    %v1882 = vadd.f32 %v1877, %v1881
    %v1883 = vmax.f32 %v1882, 0.0
    %s1884 = scalar_lea.vmem [#allocation13], 320
    %v1885 = vld [vmem:[%s1884] sm:$0xf]
    %v1886 = vld [vmem:[%s1884 + $0x4] sm:$0xf]
    %v1887 = vld [vmem:[%s1884 + $0x8] sm:$0xf]
    %v1888 = vld [vmem:[%s1884 + $0xc] sm:$0xf]
    %v1889 = vld [vmem:[%s1884 + $0x10] sm:$0xf]
    %v1890 = vld [vmem:[%s1884 + $0x14] sm:$0xf]
    %v1891 = vld [vmem:[%s1884 + $0x18] sm:$0xf]
    %v1892 = vld [vmem:[%s1884 + $0x1c] sm:$0xf]
    %v1893 = vld [vmem:[%s1884 + $0x20] sm:$0xf]
    %v1894 = vld [vmem:[%s1884 + $0x24] sm:$0xf]
    %v1895 = vld [vmem:[%s1884 + $0x28] sm:$0xf]
    %v1896 = vld [vmem:[%s1884 + $0x2c] sm:$0xf]
    %v1897 = vld [vmem:[%s1884 + $0x30] sm:$0xf]
    %v1898 = vld [vmem:[%s1884 + $0x34] sm:$0xf]
    %v1899 = vld [vmem:[%s1884 + $0x38] sm:$0xf]
    %v1900 = vld [vmem:[%s1884 + $0x3c] sm:$0xf]
    %s1901 = scalar_lea.vmem [#allocation7], 56
    %v1902 = vld [vmem:[%s1901] sm:$0x77]
    %v1903 = vpack.c.bf16 %v1883, %v1883
    %v1904 = vlaneseq
    %v1905 = vshrl.u32 %v1904, 7
    %v1906 = vsub.s32 0, %v1905
    %v1907 = vrot.slane %v1902, %v1906
    %v1924 = vunpack.c.l.b16 %v1885
    %v1925 = vunpack.c.l.b16 %v1886
    %v1926 = vunpack.c.l.b16 %v1887
    %v1927 = vunpack.c.l.b16 %v1888
    %v1928 = vunpack.c.l.b16 %v1889
    %v1929 = vunpack.c.l.b16 %v1890
    %v1930 = vunpack.c.l.b16 %v1891
    %v1931 = vunpack.c.l.b16 %v1892
    %v1932 = vunpack.c.l.b16 %v1893
    %v1933 = vunpack.c.l.b16 %v1894
    %v1934 = vunpack.c.l.b16 %v1895
    %v1935 = vunpack.c.l.b16 %v1896
    %v1936 = vunpack.c.l.b16 %v1897
    %v1937 = vunpack.c.l.b16 %v1898
    %v1938 = vunpack.c.l.b16 %v1899
    %v1939 = vunpack.c.l.b16 %v1900
    %v1940 = vpack.c.b16 %v1925, %v1924
    %v1941 = vpack.c.b16 %v1927, %v1926
    %v1942 = vpack.c.b16 %v1929, %v1928
    %v1943 = vpack.c.b16 %v1931, %v1930
    %v1944 = vpack.c.b16 %v1933, %v1932
    %v1945 = vpack.c.b16 %v1935, %v1934
    %v1946 = vpack.c.b16 %v1937, %v1936
    %v1947 = vpack.c.b16 %v1939, %v1938
    %1956 = vmatprep.subr.bf16.mxu0 0
    %1957 = vmatpush1.bf16.msra.mxu0 %v1940
    %1958 = vmatprep.subr.bf16.mxu0 0
    %1959 = vmatpush1.bf16.msra.mxu0 %v1941
    %1960 = vmatprep.subr.bf16.mxu0 0
    %1961 = vmatpush1.bf16.msra.mxu0 %v1942
    %1962 = vmatprep.subr.bf16.mxu0 0
    %1963 = vmatpush1.bf16.msra.mxu0 %v1943
    %1964 = vmatprep.subr.bf16.mxu0 0
    %1965 = vmatpush1.bf16.msra.mxu0 %v1944
    %1966 = vmatprep.subr.bf16.mxu0 0
    %1967 = vmatpush1.bf16.msra.mxu0 %v1945
    %1968 = vmatprep.subr.bf16.mxu0 0
    %1969 = vmatpush1.bf16.msra.mxu0 %v1946
    %1970 = vmatprep.subr.bf16.mxu0 0
    %1971 = vmatpush1.bf16.msra.mxu0 %v1947
    %1972 = vmatprep.subr.bf16.mxu0 0
    %1973 = vmatpush1.bf16.msra.mxu0 0
    %1974 = vmatprep.subr.bf16.mxu0 0
    %1975 = vmatpush1.bf16.msra.mxu0 0
    %1976 = vmatprep.subr.bf16.mxu0 0
    %1977 = vmatpush1.bf16.msra.mxu0 0
    %1978 = vmatprep.subr.bf16.mxu0 0
    %1979 = vmatpush1.bf16.msra.mxu0 0
    %1980 = vmatprep.subr.bf16.mxu0 0
    %1981 = vmatpush1.bf16.msra.mxu0 0
    %1982 = vmatprep.subr.bf16.mxu0 0
    %1983 = vmatpush1.bf16.msra.mxu0 0
    %1984 = vmatprep.subr.bf16.mxu0 0
    %1985 = vmatpush1.bf16.msra.mxu0 0
    %1986 = vmatprep.subr.bf16.mxu0 0
    %1987 = vmatpush1.bf16.msra.mxu0 0
    %1988 = vmatprep.mubr.bf16.mxu0 0
    %1989 = vmatmul.mubr.bf16.gmra.mrb[0].mxu0 %v1903
    %v1990 = vpop.f32.mrb[0].mxu0
    %v1991 = vadd.f32 %v1907, %v1990
    %v1992 = vpop.f32.mrb[0].mxu0
    %v1993 = vpop.f32.mrb[0].mxu0
    %v1994 = vpop.f32.mrb[0].mxu0
    %1995 = vdwg.mxu0
    %v1996 = vrot.slane %v1991, 4
    %v1997 = vadd.f32 %v1991, %v1996
    %v1998 = vrot.slane %v1997, 2
    %v1999 = vadd.f32 %v1997, %v1998
    %v2000 = vrot.slane %v1999, 1
    %v2001 = vadd.f32 %v1999, %v2000
    %v2002 = vmul.f32 %v2001, %v803
    %v2003 = vmul.f32 %v1991, %v1991
    %v2004 = vrot.slane %v2003, 4
    %v2005 = vadd.f32 %v2003, %v2004
    %v2006 = vrot.slane %v2005, 2
    %v2007 = vadd.f32 %v2005, %v2006
    %v2008 = vrot.slane %v2007, 1
    %v2009 = vadd.f32 %v2007, %v2008
    %v2010 = vmul.f32 %v2009, %v803
    %v2011 = vmul.f32 %v2002, %v2002
    %v2012 = vsub.f32 %v2010, %v2011
    %v2013 = vmax.f32 %v2012, 0.0
    %v2014 = vadd.f32 %v2013, 1e-05
    %v2015 = vrsqrt.pop %v2014
    %v2016 = vmul.f32 %v1902, %v2015
    %v2018 = vlaneseq
    %v2019 = vshrl.u32 %v2018, 7
    %v2020 = vsub.s32 1, %v2019
    %v2021 = vrot.slane %v2016, %v2020
    %v2023 = vmul.f32 %v2002, %v2021
    %v2025 = vrot.slane %v2023, 6
    %v2027 = vsub.f32 %v1902, %v2025
    %v2028 = vlaneseq
    %v2029 = vshrl.u32 %v2028, 7
    %v2030 = vsub.s32 1, %v2029
    %v2031 = vrot.slane %v2016, %v2030
    %v2032 = vmul.f32 %v1991, %v2031
    %v2033 = vlaneseq
    %v2034 = vshrl.u32 %v2033, 7
    %v2035 = vsub.s32 2, %v2034
    %v2036 = vrot.slane %v2027, %v2035
    %v2037 = vadd.f32 %v2032, %v2036
    %v2038 = vmax.f32 %v2037, 0.0
    %v2039 = vld [vmem:[#allocation15] sm:$0xff]
    %v2040 = vld [vmem:[#allocation15 + $0x8] sm:$0xff]
    %v2041 = vld [vmem:[#allocation15 + $0x10] sm:$0xff]
    %v2042 = vld [vmem:[#allocation15 + $0x18] sm:$0xff]
    %v2043 = vld [vmem:[#allocation15 + $0x20] sm:$0xff]
    %v2044 = vld [vmem:[#allocation15 + $0x28] sm:$0xff]
    %v2045 = vld [vmem:[#allocation15 + $0x30] sm:$0xff]
    %v2046 = vld [vmem:[#allocation15 + $0x38] sm:$0xff]
    %v2047 = vld [vmem:[#allocation15 + $0x40] sm:$0xff]
    %v2048 = vld [vmem:[#allocation15 + $0x48] sm:$0xff]
    %v2049 = vld [vmem:[#allocation15 + $0x50] sm:$0xff]
    %v2050 = vld [vmem:[#allocation15 + $0x58] sm:$0xff]
    %v2051 = vld [vmem:[#allocation15 + $0x60] sm:$0xff]
    %v2052 = vld [vmem:[#allocation15 + $0x68] sm:$0xff]
    %v2053 = vld [vmem:[#allocation15 + $0x70] sm:$0xff]
    %v2054 = vld [vmem:[#allocation15 + $0x78] sm:$0xff]
    %s2055 = scalar_lea.vmem [#allocation7], 64
    %v2056 = vld [vmem:[%s2055] sm:$0x77]
    %v2057 = vpack.c.bf16 %v2038, %v2038
    %v2059 = vlaneseq
    %v2060 = vshrl.u32 %v2059, 7
    %v2061 = vsub.s32 0, %v2060
    %v2062 = vrot.slane %v2056, %v2061
    %v2063 = vlaneseq
    %v2064 = vshrl.u32 %v2063, 7
    %v2065 = vsub.s32 4, %v2064
    %v2066 = vrot.slane %v2056, %v2065
    %v2069 = vlaneseq
    %v2070 = vshrl.u32 %v2069, 7
    %v2071 = vsub.s32 0, %v2070
    %v2072 = vrot.slane %v2062, %v2071
    %v2073 = vlaneseq
    %v2074 = vshrl.u32 %v2073, 7
    %v2075 = vsub.s32 0, %v2074
    %v2076 = vrot.slane %v2066, %v2075
    %v2093 = vunpack.c.l.b16 %v2039
    %v2094 = vunpack.c.h.b16 %v2039
    %v2095 = vunpack.c.l.b16 %v2040
    %v2096 = vunpack.c.h.b16 %v2040
    %v2097 = vunpack.c.l.b16 %v2041
    %v2098 = vunpack.c.h.b16 %v2041
    %v2099 = vunpack.c.l.b16 %v2042
    %v2100 = vunpack.c.h.b16 %v2042
    %v2101 = vunpack.c.l.b16 %v2043
    %v2102 = vunpack.c.h.b16 %v2043
    %v2103 = vunpack.c.l.b16 %v2044
    %v2104 = vunpack.c.h.b16 %v2044
    %v2105 = vunpack.c.l.b16 %v2045
    %v2106 = vunpack.c.h.b16 %v2045
    %v2107 = vunpack.c.l.b16 %v2046
    %v2108 = vunpack.c.h.b16 %v2046
    %v2109 = vunpack.c.l.b16 %v2047
    %v2110 = vunpack.c.h.b16 %v2047
    %v2111 = vunpack.c.l.b16 %v2048
    %v2112 = vunpack.c.h.b16 %v2048
    %v2113 = vunpack.c.l.b16 %v2049
    %v2114 = vunpack.c.h.b16 %v2049
    %v2115 = vunpack.c.l.b16 %v2050
    %v2116 = vunpack.c.h.b16 %v2050
    %v2117 = vunpack.c.l.b16 %v2051
    %v2118 = vunpack.c.h.b16 %v2051
    %v2119 = vunpack.c.l.b16 %v2052
    %v2120 = vunpack.c.h.b16 %v2052
    %v2121 = vunpack.c.l.b16 %v2053
    %v2122 = vunpack.c.h.b16 %v2053
    %v2123 = vunpack.c.l.b16 %v2054
    %v2124 = vunpack.c.h.b16 %v2054
    %v2125 = vpack.c.b16 %v2095, %v2093
    %v2126 = vpack.c.b16 %v2096, %v2094
    %v2127 = vpack.c.b16 %v2099, %v2097
    %v2128 = vpack.c.b16 %v2100, %v2098
    %v2129 = vpack.c.b16 %v2103, %v2101
    %v2130 = vpack.c.b16 %v2104, %v2102
    %v2131 = vpack.c.b16 %v2107, %v2105
    %v2132 = vpack.c.b16 %v2108, %v2106
    %v2133 = vpack.c.b16 %v2111, %v2109
    %v2134 = vpack.c.b16 %v2112, %v2110
    %v2135 = vpack.c.b16 %v2115, %v2113
    %v2136 = vpack.c.b16 %v2116, %v2114
    %v2137 = vpack.c.b16 %v2119, %v2117
    %v2138 = vpack.c.b16 %v2120, %v2118
    %v2139 = vpack.c.b16 %v2123, %v2121
    %v2140 = vpack.c.b16 %v2124, %v2122
    %2157 = vmatprep.subr.bf16.mxu0 %v2126
    %2158 = vmatpush1.bf16.msra.mxu0 %v2125
    %2159 = vmatprep.subr.bf16.mxu0 %v2128
    %2160 = vmatpush1.bf16.msra.mxu0 %v2127
    %2161 = vmatprep.subr.bf16.mxu0 %v2130
    %2162 = vmatpush1.bf16.msra.mxu0 %v2129
    %2163 = vmatprep.subr.bf16.mxu0 %v2132
    %2164 = vmatpush1.bf16.msra.mxu0 %v2131
    %2165 = vmatprep.subr.bf16.mxu0 %v2134
    %2166 = vmatpush1.bf16.msra.mxu0 %v2133
    %2167 = vmatprep.subr.bf16.mxu0 %v2136
    %2168 = vmatpush1.bf16.msra.mxu0 %v2135
    %2169 = vmatprep.subr.bf16.mxu0 %v2138
    %2170 = vmatpush1.bf16.msra.mxu0 %v2137
    %2171 = vmatprep.subr.bf16.mxu0 %v2140
    %2172 = vmatpush1.bf16.msra.mxu0 %v2139
    %2173 = vmatprep.subr.bf16.mxu0 0
    %2174 = vmatpush1.bf16.msra.mxu0 0
    %2175 = vmatprep.subr.bf16.mxu0 0
    %2176 = vmatpush1.bf16.msra.mxu0 0
    %2177 = vmatprep.subr.bf16.mxu0 0
    %2178 = vmatpush1.bf16.msra.mxu0 0
    %2179 = vmatprep.subr.bf16.mxu0 0
    %2180 = vmatpush1.bf16.msra.mxu0 0
    %2181 = vmatprep.subr.bf16.mxu0 0
    %2182 = vmatpush1.bf16.msra.mxu0 0
    %2183 = vmatprep.subr.bf16.mxu0 0
    %2184 = vmatpush1.bf16.msra.mxu0 0
    %2185 = vmatprep.subr.bf16.mxu0 0
    %2186 = vmatpush1.bf16.msra.mxu0 0
    %2187 = vmatprep.subr.bf16.mxu0 0
    %2188 = vmatpush1.bf16.msra.mxu0 0
    %2189 = vmatprep.mubr.bf16.mxu0 0
    %2190 = vmatmul.mubr.bf16.gmra.mrb[0].mxu0 %v2057
    %v2191 = vpop.f32.mrb[0].mxu0
    %v2192 = vadd.f32 %v2072, %v2191
    %v2193 = vpop.f32.mrb[0].mxu0
    %v2194 = vadd.f32 %v2076, %v2193
    %v2195 = vpop.f32.mrb[0].mxu0
    %v2196 = vpop.f32.mrb[0].mxu0
    %2197 = vdwg.mxu0
    %v2198 = vrot.slane %v2192, 4
    %v2199 = vadd.f32 %v2192, %v2198
    %v2200 = vrot.slane %v2199, 2
    %v2201 = vadd.f32 %v2199, %v2200
    %v2202 = vrot.slane %v2201, 1
    %v2203 = vadd.f32 %v2201, %v2202
    %v2204 = vrot.slane %v2194, 4
    %v2205 = vadd.f32 %v2194, %v2204
    %v2206 = vrot.slane %v2205, 2
    %v2207 = vadd.f32 %v2205, %v2206
    %v2208 = vrot.slane %v2207, 1
    %v2209 = vadd.f32 %v2207, %v2208
    %v2210 = vmul.f32 %v2203, %v803
    %v2211 = vmul.f32 %v2209, %v803
    %v2212 = vmul.f32 %v2192, %v2192
    %v2213 = vmul.f32 %v2194, %v2194
    %v2214 = vrot.slane %v2212, 4
    %v2215 = vadd.f32 %v2212, %v2214
    %v2216 = vrot.slane %v2215, 2
    %v2217 = vadd.f32 %v2215, %v2216
    %v2218 = vrot.slane %v2217, 1
    %v2219 = vadd.f32 %v2217, %v2218
    %v2220 = vrot.slane %v2213, 4
    %v2221 = vadd.f32 %v2213, %v2220
    %v2222 = vrot.slane %v2221, 2
    %v2223 = vadd.f32 %v2221, %v2222
    %v2224 = vrot.slane %v2223, 1
    %v2225 = vadd.f32 %v2223, %v2224
    %v2226 = vmul.f32 %v2219, %v803
    %v2227 = vmul.f32 %v2225, %v803
    %v2228 = vmul.f32 %v2210, %v2210
    %v2229 = vmul.f32 %v2211, %v2211
    %v2230 = vsub.f32 %v2226, %v2228
    %v2231 = vsub.f32 %v2227, %v2229
    %v2232 = vmax.f32 %v2230, 0.0
    %v2233 = vmax.f32 %v2231, 0.0
    %v2234 = vadd.f32 %v2232, 1e-05
    %v2235 = vadd.f32 %v2233, 1e-05
    %v2236 = vrsqrt.pop %v2234
    %v2237 = vrsqrt.pop %v2235
    %v2240 = vcombine.low %v2236, %v2237
    %v2241 = vrot.slane %v2240, 7
    %v2243 = vmul.f32 %v2056, %v2241
    %v2245 = vlaneseq
    %v2246 = vshrl.u32 %v2245, 7
    %v2247 = vsub.s32 1, %v2246
    %v2248 = vrot.slane %v2243, %v2247
    %v2249 = vlaneseq
    %v2250 = vshrl.u32 %v2249, 7
    %v2251 = vsub.s32 5, %v2250
    %v2252 = vrot.slane %v2243, %v2251
    %v2255 = vmul.f32 %v2210, %v2248
    %v2256 = vmul.f32 %v2211, %v2252
    %v2259 = vcombine.low %v2255, %v2256
    %v2260 = vrot.slane %v2259, 6
    %v2262 = vsub.f32 %v2056, %v2260
    %v2263 = vlaneseq
    %v2264 = vshrl.u32 %v2263, 7
    %v2265 = vsub.s32 1, %v2264
    %v2266 = vrot.slane %v2248, %v2265
    %v2267 = vlaneseq
    %v2268 = vshrl.u32 %v2267, 7
    %v2269 = vsub.s32 1, %v2268
    %v2270 = vrot.slane %v2252, %v2269
    %v2271 = vmul.f32 %v2192, %v2266
    %v2272 = vmul.f32 %v2194, %v2270
    %v2274 = vlaneseq
    %v2275 = vshrl.u32 %v2274, 7
    %v2276 = vsub.s32 2, %v2275
    %v2277 = vrot.slane %v2262, %v2276
    %v2278 = vlaneseq
    %v2279 = vshrl.u32 %v2278, 7
    %v2280 = vsub.s32 6, %v2279
    %v2281 = vrot.slane %v2262, %v2280
    %v2284 = vlaneseq
    %v2285 = vshrl.u32 %v2284, 7
    %v2286 = vsub.s32 2, %v2285
    %v2287 = vrot.slane %v2277, %v2286
    %v2288 = vlaneseq
    %v2289 = vshrl.u32 %v2288, 7
    %v2290 = vsub.s32 2, %v2289
    %v2291 = vrot.slane %v2281, %v2290
    %v2292 = vadd.f32 %v2271, %v2287
    %v2293 = vadd.f32 %v2272, %v2291
    %v2294 = vmax.f32 %v2292, 0.0
    %v2295 = vmax.f32 %v2293, 0.0
    %s2296 = smul.u32 4, 32
    %s2297 = smul.u32 %s2296, 5
    %s2298 = sshll.u32 %s2297, 4
    %2299 = dma.done [#allocation3], %s2298
    %v2300 = vpack.c.bf16 %v2294, %v2294
    %v2301 = vpack.c.bf16 %v2295, %v2295
    %v2302 = vld [vmem:[#allocation2] sm:$0xff]
    %v2303 = vld [vmem:[#allocation2 + $0x8] sm:$0xff]
    %v2304 = vld [vmem:[#allocation2 + $0x10] sm:$0xff]
    %v2305 = vld [vmem:[#allocation2 + $0x18] sm:$0xff]
    %v2306 = vld [vmem:[#allocation2 + $0x20] sm:$0xff]
    %v2307 = vld [vmem:[#allocation2 + $0x28] sm:$0xff]
    %v2308 = vld [vmem:[#allocation2 + $0x30] sm:$0xff]
    %v2309 = vld [vmem:[#allocation2 + $0x38] sm:$0xff]
    %v2310 = vld [vmem:[#allocation2 + $0x40] sm:$0xff]
    %v2311 = vld [vmem:[#allocation2 + $0x48] sm:$0xff]
    %v2312 = vld [vmem:[#allocation2 + $0x50] sm:$0xff]
    %v2313 = vld [vmem:[#allocation2 + $0x58] sm:$0xff]
    %v2314 = vld [vmem:[#allocation2 + $0x60] sm:$0xff]
    %v2315 = vld [vmem:[#allocation2 + $0x68] sm:$0xff]
    %v2316 = vld [vmem:[#allocation2 + $0x70] sm:$0xff]
    %v2317 = vld [vmem:[#allocation2 + $0x78] sm:$0xff]
    %v2318 = vld [vmem:[#allocation2 + $0x80] sm:$0xff]
    %v2319 = vld [vmem:[#allocation2 + $0x88] sm:$0xff]
    %v2320 = vld [vmem:[#allocation2 + $0x90] sm:$0xff]
    %v2321 = vld [vmem:[#allocation2 + $0x98] sm:$0xff]
    %v2322 = vld [vmem:[#allocation2 + $0xa0] sm:$0xff]
    %v2323 = vld [vmem:[#allocation2 + $0xa8] sm:$0xff]
    %v2324 = vld [vmem:[#allocation2 + $0xb0] sm:$0xff]
    %v2325 = vld [vmem:[#allocation2 + $0xb8] sm:$0xff]
    %v2326 = vld [vmem:[#allocation2 + $0xc0] sm:$0xff]
    %v2327 = vld [vmem:[#allocation2 + $0xc8] sm:$0xff]
    %v2328 = vld [vmem:[#allocation2 + $0xd0] sm:$0xff]
    %v2329 = vld [vmem:[#allocation2 + $0xd8] sm:$0xff]
    %v2330 = vld [vmem:[#allocation2 + $0xe0] sm:$0xff]
    %v2331 = vld [vmem:[#allocation2 + $0xe8] sm:$0xff]
    %v2332 = vld [vmem:[#allocation2 + $0xf0] sm:$0xff]
    %v2333 = vld [vmem:[#allocation2 + $0xf8] sm:$0xff]
    %v2334 = vld [vmem:[#allocation2 + $0x100] sm:$0xff]
    %v2335 = vld [vmem:[#allocation2 + $0x108] sm:$0xff]
    %v2336 = vld [vmem:[#allocation2 + $0x110] sm:$0xff]
    %v2337 = vld [vmem:[#allocation2 + $0x118] sm:$0xff]
    %v2338 = vld [vmem:[#allocation2 + $0x120] sm:$0xff]
    %v2339 = vld [vmem:[#allocation2 + $0x128] sm:$0xff]
    %v2340 = vld [vmem:[#allocation2 + $0x130] sm:$0xff]
    %v2341 = vld [vmem:[#allocation2 + $0x138] sm:$0xff]
    %v2342 = vld [vmem:[#allocation2 + $0x140] sm:$0xff]
    %v2343 = vld [vmem:[#allocation2 + $0x148] sm:$0xff]
    %v2344 = vld [vmem:[#allocation2 + $0x150] sm:$0xff]
    %v2345 = vld [vmem:[#allocation2 + $0x158] sm:$0xff]
    %v2346 = vld [vmem:[#allocation2 + $0x160] sm:$0xff]
    %v2347 = vld [vmem:[#allocation2 + $0x168] sm:$0xff]
    %v2348 = vld [vmem:[#allocation2 + $0x170] sm:$0xff]
    %v2349 = vld [vmem:[#allocation2 + $0x178] sm:$0xff]
    %v2350 = vld [vmem:[#allocation2 + $0x180] sm:$0xff]
    %v2351 = vld [vmem:[#allocation2 + $0x188] sm:$0xff]
    %v2352 = vld [vmem:[#allocation2 + $0x190] sm:$0xff]
    %v2353 = vld [vmem:[#allocation2 + $0x198] sm:$0xff]
    %v2354 = vld [vmem:[#allocation2 + $0x1a0] sm:$0xff]
    %v2355 = vld [vmem:[#allocation2 + $0x1a8] sm:$0xff]
    %v2356 = vld [vmem:[#allocation2 + $0x1b0] sm:$0xff]
    %v2357 = vld [vmem:[#allocation2 + $0x1b8] sm:$0xff]
    %v2358 = vld [vmem:[#allocation2 + $0x1c0] sm:$0xff]
    %v2359 = vld [vmem:[#allocation2 + $0x1c8] sm:$0xff]
    %v2360 = vld [vmem:[#allocation2 + $0x1d0] sm:$0xff]
    %v2361 = vld [vmem:[#allocation2 + $0x1d8] sm:$0xff]
    %v2362 = vld [vmem:[#allocation2 + $0x1e0] sm:$0xff]
    %v2363 = vld [vmem:[#allocation2 + $0x1e8] sm:$0xff]
    %v2364 = vld [vmem:[#allocation2 + $0x1f0] sm:$0xff]
    %v2365 = vld [vmem:[#allocation2 + $0x1f8] sm:$0xff]
    %v2366 = vld [vmem:[#allocation2 + $0x200] sm:$0xff]
    %v2367 = vld [vmem:[#allocation2 + $0x208] sm:$0xff]
    %v2368 = vld [vmem:[#allocation2 + $0x210] sm:$0xff]
    %v2369 = vld [vmem:[#allocation2 + $0x218] sm:$0xff]
    %v2370 = vld [vmem:[#allocation2 + $0x220] sm:$0xff]
    %v2371 = vld [vmem:[#allocation2 + $0x228] sm:$0xff]
    %v2372 = vld [vmem:[#allocation2 + $0x230] sm:$0xff]
    %v2373 = vld [vmem:[#allocation2 + $0x238] sm:$0xff]
    %v2374 = vld [vmem:[#allocation2 + $0x240] sm:$0xff]
    %v2375 = vld [vmem:[#allocation2 + $0x248] sm:$0xff]
    %v2376 = vld [vmem:[#allocation2 + $0x250] sm:$0xff]
    %v2377 = vld [vmem:[#allocation2 + $0x258] sm:$0xff]
    %v2378 = vld [vmem:[#allocation2 + $0x260] sm:$0xff]
    %v2379 = vld [vmem:[#allocation2 + $0x268] sm:$0xff]
    %v2380 = vld [vmem:[#allocation2 + $0x270] sm:$0xff]
    %v2381 = vld [vmem:[#allocation2 + $0x278] sm:$0xff]
    %v2382 = vld [vmem:[#allocation9] sm:$0x1f]
    %v2384 = vlaneseq
    %v2385 = vshrl.u32 %v2384, 7
    %v2386 = vsub.s32 0, %v2385
    %v2387 = vrot.slane %v2382, %v2386
    %v2388 = vlaneseq
    %v2389 = vshrl.u32 %v2388, 7
    %v2390 = vsub.s32 1, %v2389
    %v2391 = vrot.slane %v2382, %v2390
    %v2392 = vlaneseq
    %v2393 = vshrl.u32 %v2392, 7
    %v2394 = vsub.s32 2, %v2393
    %v2395 = vrot.slane %v2382, %v2394
    %v2396 = vlaneseq
    %v2397 = vshrl.u32 %v2396, 7
    %v2398 = vsub.s32 3, %v2397
    %v2399 = vrot.slane %v2382, %v2398
    %v2400 = vlaneseq
    %v2401 = vshrl.u32 %v2400, 7
    %v2402 = vsub.s32 4, %v2401
    %v2403 = vrot.slane %v2382, %v2402
    %2409 = vmatprep.subr.bf16.mxu0 %v2303
    %2410 = vmatpush1.bf16.msra.mxu0 %v2302
    %2411 = vmatprep.subr.bf16.mxu0 %v2308
    %2412 = vmatpush1.bf16.msra.mxu0 %v2307
    %2413 = vmatprep.subr.bf16.mxu0 %v2313
    %2414 = vmatpush1.bf16.msra.mxu0 %v2312
    %2415 = vmatprep.subr.bf16.mxu0 %v2318
    %2416 = vmatpush1.bf16.msra.mxu0 %v2317
    %2417 = vmatprep.subr.bf16.mxu0 %v2323
    %2418 = vmatpush1.bf16.msra.mxu0 %v2322
    %2419 = vmatprep.subr.bf16.mxu0 %v2328
    %2420 = vmatpush1.bf16.msra.mxu0 %v2327
    %2421 = vmatprep.subr.bf16.mxu0 %v2333
    %2422 = vmatpush1.bf16.msra.mxu0 %v2332
    %2423 = vmatprep.subr.bf16.mxu0 %v2338
    %2424 = vmatpush1.bf16.msra.mxu0 %v2337
    %2425 = vmatprep.subr.bf16.mxu0 %v2343
    %2426 = vmatpush1.bf16.msra.mxu0 %v2342
    %2427 = vmatprep.subr.bf16.mxu0 %v2348
    %2428 = vmatpush1.bf16.msra.mxu0 %v2347
    %2429 = vmatprep.subr.bf16.mxu0 %v2353
    %2430 = vmatpush1.bf16.msra.mxu0 %v2352
    %2431 = vmatprep.subr.bf16.mxu0 %v2358
    %2432 = vmatpush1.bf16.msra.mxu0 %v2357
    %2433 = vmatprep.subr.bf16.mxu0 %v2363
    %2434 = vmatpush1.bf16.msra.mxu0 %v2362
    %2435 = vmatprep.subr.bf16.mxu0 %v2368
    %2436 = vmatpush1.bf16.msra.mxu0 %v2367
    %2437 = vmatprep.subr.bf16.mxu0 %v2373
    %2438 = vmatpush1.bf16.msra.mxu0 %v2372
    %2439 = vmatprep.subr.bf16.mxu0 %v2378
    %2440 = vmatpush1.bf16.msra.mxu0 %v2377
    %2441 = vmatprep.mubr.bf16.mxu0 %v2301
    %2442 = vmatmul.mubr.bf16.gmra.mrb[0].mxu0 %v2300
    %v2443 = vpop.f32.mrb[0].mxu0
    %v2444 = vadd.f32 %v2387, %v2443
    %v2445 = vpop.f32.mrb[0].mxu0
    %v2446 = vadd.f32 %v2391, %v2445
    %v2447 = vpop.f32.mrb[0].mxu0
    %v2448 = vpop.f32.mrb[0].mxu0
    %2449 = vdwg.mxu0
    %2450 = vmatprep.subr.bf16.mxu0 %v2305
    %2451 = vmatpush1.bf16.msra.mxu0 %v2304
    %2452 = vmatprep.subr.bf16.mxu0 %v2310
    %2453 = vmatpush1.bf16.msra.mxu0 %v2309
    %2454 = vmatprep.subr.bf16.mxu0 %v2315
    %2455 = vmatpush1.bf16.msra.mxu0 %v2314
    %2456 = vmatprep.subr.bf16.mxu0 %v2320
    %2457 = vmatpush1.bf16.msra.mxu0 %v2319
    %2458 = vmatprep.subr.bf16.mxu0 %v2325
    %2459 = vmatpush1.bf16.msra.mxu0 %v2324
    %2460 = vmatprep.subr.bf16.mxu0 %v2330
    %2461 = vmatpush1.bf16.msra.mxu0 %v2329
    %2462 = vmatprep.subr.bf16.mxu0 %v2335
    %2463 = vmatpush1.bf16.msra.mxu0 %v2334
    %2464 = vmatprep.subr.bf16.mxu0 %v2340
    %2465 = vmatpush1.bf16.msra.mxu0 %v2339
    %2466 = vmatprep.subr.bf16.mxu0 %v2345
    %2467 = vmatpush1.bf16.msra.mxu0 %v2344
    %2468 = vmatprep.subr.bf16.mxu0 %v2350
    %2469 = vmatpush1.bf16.msra.mxu0 %v2349
    %2470 = vmatprep.subr.bf16.mxu0 %v2355
    %2471 = vmatpush1.bf16.msra.mxu0 %v2354
    %2472 = vmatprep.subr.bf16.mxu0 %v2360
    %2473 = vmatpush1.bf16.msra.mxu0 %v2359
    %2474 = vmatprep.subr.bf16.mxu0 %v2365
    %2475 = vmatpush1.bf16.msra.mxu0 %v2364
    %2476 = vmatprep.subr.bf16.mxu0 %v2370
    %2477 = vmatpush1.bf16.msra.mxu0 %v2369
    %2478 = vmatprep.subr.bf16.mxu0 %v2375
    %2479 = vmatpush1.bf16.msra.mxu0 %v2374
    %2480 = vmatprep.subr.bf16.mxu0 %v2380
    %2481 = vmatpush1.bf16.msra.mxu0 %v2379
    %2482 = vmatprep.mubr.bf16.mxu0 %v2301
    %2483 = vmatmul.mubr.bf16.gmra.mrb[0].mxu0 %v2300
    %v2484 = vpop.f32.mrb[0].mxu0
    %v2485 = vadd.f32 %v2395, %v2484
    %v2486 = vpop.f32.mrb[0].mxu0
    %v2487 = vadd.f32 %v2399, %v2486
    %v2488 = vpop.f32.mrb[0].mxu0
    %v2489 = vpop.f32.mrb[0].mxu0
    %2490 = vdwg.mxu0
    %2491 = vmatprep.subr.bf16.mxu0 0
    %2492 = vmatpush1.bf16.msra.mxu0 %v2306
    %2493 = vmatprep.subr.bf16.mxu0 0
    %2494 = vmatpush1.bf16.msra.mxu0 %v2311
    %2495 = vmatprep.subr.bf16.mxu0 0
    %2496 = vmatpush1.bf16.msra.mxu0 %v2316
    %2497 = vmatprep.subr.bf16.mxu0 0
    %2498 = vmatpush1.bf16.msra.mxu0 %v2321
    %2499 = vmatprep.subr.bf16.mxu0 0
    %2500 = vmatpush1.bf16.msra.mxu0 %v2326
    %2501 = vmatprep.subr.bf16.mxu0 0
    %2502 = vmatpush1.bf16.msra.mxu0 %v2331
    %2503 = vmatprep.subr.bf16.mxu0 0
    %2504 = vmatpush1.bf16.msra.mxu0 %v2336
    %2505 = vmatprep.subr.bf16.mxu0 0
    %2506 = vmatpush1.bf16.msra.mxu0 %v2341
    %2507 = vmatprep.subr.bf16.mxu0 0
    %2508 = vmatpush1.bf16.msra.mxu0 %v2346
    %2509 = vmatprep.subr.bf16.mxu0 0
    %2510 = vmatpush1.bf16.msra.mxu0 %v2351
    %2511 = vmatprep.subr.bf16.mxu0 0
    %2512 = vmatpush1.bf16.msra.mxu0 %v2356
    %2513 = vmatprep.subr.bf16.mxu0 0
    %2514 = vmatpush1.bf16.msra.mxu0 %v2361
    %2515 = vmatprep.subr.bf16.mxu0 0
    %2516 = vmatpush1.bf16.msra.mxu0 %v2366
    %2517 = vmatprep.subr.bf16.mxu0 0
    %2518 = vmatpush1.bf16.msra.mxu0 %v2371
    %2519 = vmatprep.subr.bf16.mxu0 0
    %2520 = vmatpush1.bf16.msra.mxu0 %v2376
    %2521 = vmatprep.subr.bf16.mxu0 0
    %2522 = vmatpush1.bf16.msra.mxu0 %v2381
    %2523 = vmatprep.mubr.bf16.mxu0 %v2301
    %2524 = vmatmul.mubr.bf16.gmra.mrb[0].mxu0 %v2300
    %v2525 = vpop.f32.mrb[0].mxu0
    %v2526 = vadd.f32 %v2403, %v2525
    %v2527 = vpop.f32.mrb[0].mxu0
    %v2528 = vpop.f32.mrb[0].mxu0
    %v2529 = vpop.f32.mrb[0].mxu0
    %2530 = vdwg.mxu0
    %2531 = vst [vmem:[#allocation16] sm:$0xff] %v2444
    %2532 = vst [vmem:[#allocation16 + $0x8] sm:$0xff] %v2446
    %2533 = vst [vmem:[#allocation16 + $0x10] sm:$0xff] %v2485
    %2534 = vst [vmem:[#allocation16 + $0x18] sm:$0xff] %v2487
    %2535 = vst [vmem:[#allocation16 + $0x20] sm:$0xff] %v2526
    // Predicated region
    $region58: #{auto_encoder_forward.1} parent=1 // pred_check
      _
    $region59: #{auto_encoder_forward.1} parent=1 // pred_check_branch
      %2537 = sbr.rel (0) target = $region61
    $region60: #{auto_encoder_forward.1} parent=1 // pred_region
      %s2539 = ssub.s32 640, 640
      %2540 = vsyncadd [#allocation6], %s2539
      %s2542 = sshll.u32 [#allocation16], 4
      %s2543 = int_to_ptr.vmem [resolvable:$true] %s2542
      %2545 = dma.vmem_to_hbm [thread:$0]  %s2543, 640, %s8, [#allocation6]
    $region61: #{auto_encoder_forward.1} parent=1 // pred_fallthru
      _
    // Predicated region
    $region62: #{auto_encoder_forward.1} parent=1 // pred_check
      _
    $region63: #{auto_encoder_forward.1} parent=1 // pred_check_branch
      %2547 = sbr.rel (0) target = $region65
    $region64: #{auto_encoder_forward.1} parent=1 // pred_region
      %s2549 = ssub.s32 128, 128
      %2550 = vsyncadd [#allocation18], %s2549
      %s2552 = sshll.u32 [#allocation17], 4
      %s2553 = int_to_ptr.vmem [resolvable:$true] %s2552
      %2555 = dma.vmem_to_hbm [thread:$0]  %s2553, 128, %s9, [#allocation18]
    $region65: #{auto_encoder_forward.1} parent=1 // pred_fallthru
      _
    // Predicated region
    $region66: #{auto_encoder_forward.1} parent=1 // pred_check
      _
    $region67: #{auto_encoder_forward.1} parent=1 // pred_check_branch
      %2557 = sbr.rel (0) target = $region69
    $region68: #{auto_encoder_forward.1} parent=1 // pred_region
      %2558 = dma.done [#allocation6], 640
    $region69: #{auto_encoder_forward.1} parent=1 // pred_fallthru
      _
    // Predicated region
    $region70: #{auto_encoder_forward.1} parent=1 // pred_check
      _
    $region71: #{auto_encoder_forward.1} parent=1 // pred_check_branch
      %2560 = sbr.rel (0) target = $region73
    $region72: #{auto_encoder_forward.1} parent=1 // pred_region
      %2561 = dma.done [#allocation18], 128
    $region73: #{auto_encoder_forward.1} parent=1 // pred_fallthru
      _
    %2562 = vsyncpa [#allocation5], 1
    %2563 = vsyncpa [#allocation8], 1
    %2564 = vsyncpa [#allocation11], 1
    %2565 = vsyncpa [#allocation14], 1
    %2566 = vsyncpa [#allocation6], 1
    %2567 = vsyncpa [#allocation18], 1
  %2568 = vsyncmov [#allocation3]
  %s2569 = vpop.sfrf %2568
  %p2570 = scmp.eq.s32.totalorder %s2569, 0
  %p2571 = pneg %p2570
  %2573 = shalt.err (%p2571)

</llo_original>
